<compile_context>
chip_gen: v5e
topology: v5e:2x2
jax: 0.10.0
libtpu: 0.0.40
codegen_flags: <defaults>
</compile_context>

<pallas_src>
import math

import jax
import jax.numpy as jnp
from jax import lax
from jax.experimental import pallas as pl
from jax.experimental.pallas import tpu as pltpu

# ---- synthetic "small BERT" hyper-parameters ----
VOCAB = 30
TYPE_VOCAB = 2
MAX_POS = 64
HIDDEN = 32
NUM_HEADS = 4
HEAD_DIM = HIDDEN // NUM_HEADS
INTERMEDIATE = 64
NUM_LAYERS = 2
CLASS_NUM = 9
CLASS_PAD = 128                    # lane-dense classifier output width
LORA_R = 8
LORA_ALPHA = 16
LORA_SCALING = LORA_ALPHA / LORA_R
LN_EPS = 1e-12                     # BERT LayerNorm eps
ATTN_SCALE = 1.0 / math.sqrt(HEAD_DIM)


# ----------------------------- in-kernel helpers -----------------------------

def _layernorm(x, g, b):
    mu = jnp.mean(x, axis=-1, keepdims=True)
    d = x - mu
    var = jnp.mean(d * d, axis=-1, keepdims=True)
    return d * lax.rsqrt(var + LN_EPS) * g + b


def _gelu(x):
    # TODO(synk): HF BERT default is the exact erf GELU; tanh-approx kept for a
    # guaranteed-lowering EUP path (tiny numerical drift vs. the reference).
    c = math.sqrt(2.0 / math.pi)
    return 0.5 * x * (1.0 + jnp.tanh(c * (x + 0.044715 * x * x * x)))


# ----------------------------- the fused kernel -----------------------------

def _fused_forward_kernel(
    emb_ref,                      # (1, S, H)   summed embeddings for batch b
    emb_ln_g_ref, emb_ln_b_ref,   # (1, H)
    qkv_w_ref, qkv_b_ref,         # (L, H, 3H), (L, 1, 3H)  (LoRA already folded)
    ao_w_ref, ao_b_ref,           # (L, H, H),  (L, 1, H)
    ln1_g_ref, ln1_b_ref,         # (L, 1, H)
    i_w_ref, i_b_ref,             # (L, H, I),  (L, 1, I)
    o_w_ref, o_b_ref,             # (L, I, H),  (L, 1, H)
    ln2_g_ref, ln2_b_ref,         # (L, 1, H)
    cls_w_ref, cls_b_ref,         # (H, CP),    (1, CP)
    out_ref,                      # (1, S, CP)
):
    H = HIDDEN
    d = HEAD_DIM

    # embedding LayerNorm
    x = _layernorm(emb_ref[0], emb_ln_g_ref[...], emb_ln_b_ref[...])    # [S, H]

    for l in range(NUM_LAYERS):
        # ---- fused QKV projection (one MXU pass) ----
        qkv = (jnp.dot(x, qkv_w_ref[l], preferred_element_type=jnp.float32)
               + qkv_b_ref[l])                                          # [S, 3H]

        ao_w = ao_w_ref[l]                                              # [H, H]
        attn = ao_b_ref[l]                                              # [1, H] -> broadcasts
        for h in range(NUM_HEADS):
            qh = qkv[:, h * d:(h + 1) * d]                              # [S, d]
            kh = qkv[:, H + h * d:H + (h + 1) * d]                      # [S, d]
            vh = qkv[:, 2 * H + h * d:2 * H + (h + 1) * d]              # [S, d]
            # q . k^T via contracting dims (no explicit transpose)
            s = lax.dot_general(qh, kh, (((1,), (1,)), ((), ())),
                                preferred_element_type=jnp.float32) * ATTN_SCALE
            m = jnp.max(s, axis=-1, keepdims=True)
            e = jnp.exp(s - m)
            p = e * pl.reciprocal(jnp.sum(e, axis=-1, keepdims=True), approx=True)
            ch = jnp.dot(p, vh, preferred_element_type=jnp.float32)     # [S, d]
            # head merge folded into the output projection: ctx @ W_o ==
            # sum_h ch @ W_o[h*d:(h+1)*d, :]  (no concat / transpose needed)
            attn = attn + jnp.dot(ch, ao_w[h * d:(h + 1) * d, :],
                                  preferred_element_type=jnp.float32)   # [S, H]

        # attention output: bias + residual + LayerNorm epilogue
        x = _layernorm(attn + x, ln1_g_ref[l], ln1_b_ref[l])

        # feed-forward: GELU intermediate, then bias + residual + LayerNorm
        inter = _gelu(jnp.dot(x, i_w_ref[l], preferred_element_type=jnp.float32)
                      + i_b_ref[l])                                     # [S, I]
        ffn = (jnp.dot(inter, o_w_ref[l], preferred_element_type=jnp.float32)
               + o_b_ref[l])                                            # [S, H]
        x = _layernorm(ffn + x, ln2_g_ref[l], ln2_b_ref[l])

    # classifier head (padded to 128 lanes for unmasked lane-dense stores)
    logits = (jnp.dot(x, cls_w_ref[...], preferred_element_type=jnp.float32)
              + cls_b_ref[...])                                         # [S, CP]
    out_ref[0] = logits.astype(out_ref.dtype)


# ----------------------------- kernel wrapper -----------------------------

def _full_spec(shape):
    n = len(shape)
    return pl.BlockSpec(shape, lambda b, _n=n: (0,) * _n)


def fused_forward(emb, p):
    B, S, H = emb.shape
    in_specs = [
        pl.BlockSpec((1, S, H), lambda b: (b, 0, 0)),                   # emb
        _full_spec(p["emb_ln_g"].shape), _full_spec(p["emb_ln_b"].shape),
        _full_spec(p["qkv_w"].shape), _full_spec(p["qkv_b"].shape),
        _full_spec(p["ao_w"].shape), _full_spec(p["ao_b"].shape),
        _full_spec(p["ln1_g"].shape), _full_spec(p["ln1_b"].shape),
        _full_spec(p["i_w"].shape), _full_spec(p["i_b"].shape),
        _full_spec(p["o_w"].shape), _full_spec(p["o_b"].shape),
        _full_spec(p["ln2_g"].shape), _full_spec(p["ln2_b"].shape),
        _full_spec(p["cls_w"].shape), _full_spec(p["cls_b"].shape),
    ]
    return pl.pallas_call(
        _fused_forward_kernel,
        out_shape=jax.ShapeDtypeStruct((B, S, CLASS_PAD), jnp.float32),
        grid=(B,),
        in_specs=in_specs,
        out_specs=pl.BlockSpec((1, S, CLASS_PAD), lambda b: (b, 0, 0)),
        compiler_params=pltpu.CompilerParams(dimension_semantics=("parallel",)),
    )(emb, p["emb_ln_g"], p["emb_ln_b"],
      p["qkv_w"], p["qkv_b"], p["ao_w"], p["ao_b"],
      p["ln1_g"], p["ln1_b"], p["i_w"], p["i_b"],
      p["o_w"], p["o_b"], p["ln2_g"], p["ln2_b"],
      p["cls_w"], p["cls_b"])


# ----------------------------- model forward -----------------------------

def torch_model_forward(p, ids):
    """Equivalent of TorchModel.forward(x, target=None) with use_crf=False."""
    B, S = ids.shape
    # TODO(synk): embedding table gather + position/type adds stay in XLA glue
    # (no Pallas win at this size); everything after it runs in ONE kernel.
    emb = (p["word_emb"][ids]
           + p["pos_emb"][:S][None, :, :]
           + p["type_emb"][0][None, None, :])
    logits_pad = fused_forward(emb, p)
    # TODO(synk): BERT pooler output is discarded by `x, _ = self.bert(x)`; CRF
    # decode / CrossEntropyLoss training branches are not implemented.
    return logits_pad[:, :, :CLASS_NUM]


# ----------------------------- parameter prep -----------------------------

def init_params(key):
    keys = iter(jax.random.split(key, 256))

    def normal(shape, scale=0.02):
        return scale * jax.random.normal(next(keys), shape, jnp.float32)

    ones_h = jnp.ones((HIDDEN,), jnp.float32)
    zeros_h = jnp.zeros((HIDDEN,), jnp.float32)

    params = {
        "word_emb": normal((VOCAB, HIDDEN)),
        "pos_emb": normal((MAX_POS, HIDDEN)),
        "type_emb": normal((TYPE_VOCAB, HIDDEN)),
        "emb_ln_g": ones_h, "emb_ln_b": zeros_h,
        "cls_w": normal((HIDDEN, CLASS_NUM)),
        "cls_b": jnp.zeros((CLASS_NUM,), jnp.float32),
        "layers": [],
    }
    for _ in range(NUM_LAYERS):
        # NOTE: loralib inits lora_B to zero; both factors get small random
        # values here so the LoRA contribution is actually exercised.
        params["layers"].append({
            "q_w": normal((HIDDEN, HIDDEN)), "q_b": zeros_h,
            "q_la": normal((HIDDEN, LORA_R)), "q_lb": normal((LORA_R, HIDDEN)),
            "k_w": normal((HIDDEN, HIDDEN)), "k_b": zeros_h,
            "v_w": normal((HIDDEN, HIDDEN)), "v_b": zeros_h,
            "v_la": normal((HIDDEN, LORA_R)), "v_lb": normal((LORA_R, HIDDEN)),
            "ao_w": normal((HIDDEN, HIDDEN)), "ao_b": zeros_h,
            "ln1_g": ones_h, "ln1_b": zeros_h,
            "i_w": normal((HIDDEN, INTERMEDIATE)),
            "i_b": jnp.zeros((INTERMEDIATE,), jnp.float32),
            "o_w": normal((INTERMEDIATE, HIDDEN)), "o_b": zeros_h,
            "ln2_g": ones_h, "ln2_b": zeros_h,
        })
    return params


def prepare_params(params):
    """One-time prep: fold LoRA into q/v weights, fuse QKV, stack per-layer
    params with a leading layer dim, pad the classifier to 128 lanes."""
    qkv_w, qkv_b, ao_w, ao_b = [], [], [], []
    ln1_g, ln1_b, i_w, i_b, o_w, o_b, ln2_g, ln2_b = ([] for _ in range(8))
    for lp in params["layers"]:
        q_w = lp["q_w"] + LORA_SCALING * (lp["q_la"] @ lp["q_lb"])
        v_w = lp["v_w"] + LORA_SCALING * (lp["v_la"] @ lp["v_lb"])
        qkv_w.append(jnp.concatenate([q_w, lp["k_w"], v_w], axis=1))
        qkv_b.append(jnp.concatenate([lp["q_b"], lp["k_b"], lp["v_b"]])[None, :])
        ao_w.append(lp["ao_w"]);          ao_b.append(lp["ao_b"][None, :])
        ln1_g.append(lp["ln1_g"][None, :]); ln1_b.append(lp["ln1_b"][None, :])
        i_w.append(lp["i_w"]);            i_b.append(lp["i_b"][None, :])
        o_w.append(lp["o_w"]);            o_b.append(lp["o_b"][None, :])
        ln2_g.append(lp["ln2_g"][None, :]); ln2_b.append(lp["ln2_b"][None, :])

    cls_w = jnp.zeros((HIDDEN, CLASS_PAD), jnp.float32).at[:, :CLASS_NUM].set(params["cls_w"])
    cls_b = jnp.zeros((CLASS_PAD,), jnp.float32).at[:CLASS_NUM].set(params["cls_b"])

    return {
        "word_emb": params["word_emb"],
        "pos_emb": params["pos_emb"],
        "type_emb": params["type_emb"],
        "emb_ln_g": params["emb_ln_g"][None, :],
        "emb_ln_b": params["emb_ln_b"][None, :],
        "qkv_w": jnp.stack(qkv_w), "qkv_b": jnp.stack(qkv_b),
        "ao_w": jnp.stack(ao_w), "ao_b": jnp.stack(ao_b),
        "ln1_g": jnp.stack(ln1_g), "ln1_b": jnp.stack(ln1_b),
        "i_w": jnp.stack(i_w), "i_b": jnp.stack(i_b),
        "o_w": jnp.stack(o_w), "o_b": jnp.stack(o_b),
        "ln2_g": jnp.stack(ln2_g), "ln2_b": jnp.stack(ln2_b),
        "cls_w": cls_w, "cls_b": cls_b[None, :],
    }


if __name__ == "__main__":
    key = jax.random.PRNGKey(0)
    pkey, xkey = jax.random.split(key)
    params = prepare_params(init_params(pkey))

    B, S = 2, 8
    ids = jax.random.randint(xkey, (B, S), 0, VOCAB, dtype=jnp.int32)

    fwd = jax.jit(torch_model_forward)
    logits = jax.block_until_ready(fwd(params, ids))

    assert logits.shape == (B, S, CLASS_NUM)
    assert logits.dtype == jnp.float32
    assert bool(jnp.all(jnp.isfinite(logits)))
    print("KERNEL_OK")
</pallas_src>

<mosaic_0001>
module attributes {stable_mosaic.version = 11 : i64} {
  func.func @_fused_forward_kernel(%arg0: i32, %arg1: memref<1x8x32xf32, #tpu.memory_space<vmem>>, %arg2: memref<1x32xf32, #tpu.memory_space<vmem>>, %arg3: memref<1x32xf32, #tpu.memory_space<vmem>>, %arg4: memref<2x32x96xf32, #tpu.memory_space<vmem>>, %arg5: memref<2x1x96xf32, #tpu.memory_space<vmem>>, %arg6: memref<2x32x32xf32, #tpu.memory_space<vmem>>, %arg7: memref<2x1x32xf32, #tpu.memory_space<vmem>>, %arg8: memref<2x1x32xf32, #tpu.memory_space<vmem>>, %arg9: memref<2x1x32xf32, #tpu.memory_space<vmem>>, %arg10: memref<2x32x64xf32, #tpu.memory_space<vmem>>, %arg11: memref<2x1x64xf32, #tpu.memory_space<vmem>>, %arg12: memref<2x64x32xf32, #tpu.memory_space<vmem>>, %arg13: memref<2x1x32xf32, #tpu.memory_space<vmem>>, %arg14: memref<2x1x32xf32, #tpu.memory_space<vmem>>, %arg15: memref<2x1x32xf32, #tpu.memory_space<vmem>>, %arg16: memref<32x128xf32, #tpu.memory_space<vmem>>, %arg17: memref<1x128xf32, #tpu.memory_space<vmem>>, %arg18: memref<1x8x128xf32, #tpu.memory_space<vmem>>) attributes {dimension_semantics = [#tpu.dimension_semantics<parallel>], iteration_bounds = array<i64: 2>, scalar_prefetch = 0 : i64, scratch_operands = 0 : i64, tpu.core_type = #tpu.core_type<tc>, window_params = [{transform_indices = @transform_0, window_bounds = array<i64: 1, 8, 32>}, {pipeline_mode = #tpu.pipeline_mode<synchronous>, transform_indices = @transform_1, window_bounds = array<i64: 1, 32>}, {pipeline_mode = #tpu.pipeline_mode<synchronous>, transform_indices = @transform_2, window_bounds = array<i64: 1, 32>}, {pipeline_mode = #tpu.pipeline_mode<synchronous>, transform_indices = @transform_3, window_bounds = array<i64: 2, 32, 96>}, {pipeline_mode = #tpu.pipeline_mode<synchronous>, transform_indices = @transform_4, window_bounds = array<i64: 2, 1, 96>}, {pipeline_mode = #tpu.pipeline_mode<synchronous>, transform_indices = @transform_5, window_bounds = array<i64: 2, 32, 32>}, {pipeline_mode = #tpu.pipeline_mode<synchronous>, transform_indices = @transform_6, window_bounds = array<i64: 2, 1, 32>}, {pipeline_mode = #tpu.pipeline_mode<synchronous>, transform_indices = @transform_7, window_bounds = array<i64: 2, 1, 32>}, {pipeline_mode = #tpu.pipeline_mode<synchronous>, transform_indices = @transform_8, window_bounds = array<i64: 2, 1, 32>}, {pipeline_mode = #tpu.pipeline_mode<synchronous>, transform_indices = @transform_9, window_bounds = array<i64: 2, 32, 64>}, {pipeline_mode = #tpu.pipeline_mode<synchronous>, transform_indices = @transform_10, window_bounds = array<i64: 2, 1, 64>}, {pipeline_mode = #tpu.pipeline_mode<synchronous>, transform_indices = @transform_11, window_bounds = array<i64: 2, 64, 32>}, {pipeline_mode = #tpu.pipeline_mode<synchronous>, transform_indices = @transform_12, window_bounds = array<i64: 2, 1, 32>}, {pipeline_mode = #tpu.pipeline_mode<synchronous>, transform_indices = @transform_13, window_bounds = array<i64: 2, 1, 32>}, {pipeline_mode = #tpu.pipeline_mode<synchronous>, transform_indices = @transform_14, window_bounds = array<i64: 2, 1, 32>}, {pipeline_mode = #tpu.pipeline_mode<synchronous>, transform_indices = @transform_15, window_bounds = array<i64: 32, 128>}, {pipeline_mode = #tpu.pipeline_mode<synchronous>, transform_indices = @transform_16, window_bounds = array<i64: 1, 128>}, {transform_indices = @transform_17, window_bounds = array<i64: 1, 8, 128>}]} {
    %c0 = arith.constant 0 : index
    %c0_0 = arith.constant 0 : index
    %c0_1 = arith.constant 0 : index
    %0 = vector.load %arg1[%c0, %c0_0, %c0_1] : memref<1x8x32xf32, #tpu.memory_space<vmem>>, vector<1x8x32xf32>
    %1 = vector.shape_cast %0 : vector<1x8x32xf32> to vector<8x32xf32>
    %c0_2 = arith.constant 0 : index
    %c0_3 = arith.constant 0 : index
    %2 = vector.load %arg2[%c0_2, %c0_3] : memref<1x32xf32, #tpu.memory_space<vmem>>, vector<1x32xf32>
    %c0_4 = arith.constant 0 : index
    %c0_5 = arith.constant 0 : index
    %3 = vector.load %arg3[%c0_4, %c0_5] : memref<1x32xf32, #tpu.memory_space<vmem>>, vector<1x32xf32>
    %cst = arith.constant dense<0.000000e+00> : vector<8xf32>
    %4 = vector.multi_reduction <add>, %1, %cst [1] : vector<8x32xf32> to vector<8xf32>
    %5 = vector.shape_cast %4 : vector<8xf32> to vector<8x1xf32>
    %cst_6 = arith.constant 3.200000e+01 : f32
    %6 = vector.broadcast %cst_6 : f32 to vector<8x1xf32>
    %7 = arith.divf %5, %6 : vector<8x1xf32>
    %8 = vector.broadcast %7 : vector<8x1xf32> to vector<8x32xf32>
    %9 = arith.subf %1, %8 : vector<8x32xf32>
    %10 = arith.mulf %9, %9 : vector<8x32xf32>
    %cst_7 = arith.constant dense<0.000000e+00> : vector<8xf32>
    %11 = vector.multi_reduction <add>, %10, %cst_7 [1] : vector<8x32xf32> to vector<8xf32>
    %12 = vector.shape_cast %11 : vector<8xf32> to vector<8x1xf32>
    %cst_8 = arith.constant 3.200000e+01 : f32
    %13 = vector.broadcast %cst_8 : f32 to vector<8x1xf32>
    %14 = arith.divf %12, %13 : vector<8x1xf32>
    %cst_9 = arith.constant 9.99999996E-13 : f32
    %15 = vector.broadcast %cst_9 : f32 to vector<8x1xf32>
    %16 = arith.addf %14, %15 : vector<8x1xf32>
    %17 = math.rsqrt %16 : vector<8x1xf32>
    %18 = vector.broadcast %17 : vector<8x1xf32> to vector<8x32xf32>
    %19 = arith.mulf %9, %18 : vector<8x32xf32>
    %20 = vector.broadcast %2 : vector<1x32xf32> to vector<8x32xf32>
    %21 = arith.mulf %19, %20 : vector<8x32xf32>
    %22 = vector.broadcast %3 : vector<1x32xf32> to vector<8x32xf32>
    %23 = arith.addf %21, %22 : vector<8x32xf32>
    %c0_10 = arith.constant 0 : index
    %c0_11 = arith.constant 0 : index
    %c0_12 = arith.constant 0 : index
    %24 = vector.load %arg4[%c0_10, %c0_11, %c0_12] : memref<2x32x96xf32, #tpu.memory_space<vmem>>, vector<1x32x96xf32>
    %25 = vector.shape_cast %24 : vector<1x32x96xf32> to vector<32x96xf32>
    %cst_13 = arith.constant dense<0.000000e+00> : vector<8x96xf32>
    %26 = tpu.matmul %23, %25, %cst_13 {dimension_numbers = #tpu.dot_dimension_numbers<[1], [0], [0], [1], [0, 0, 1, 1], [], []>} : vector<8x32xf32>, vector<32x96xf32>, vector<8x96xf32> -> vector<8x96xf32>
    %c0_14 = arith.constant 0 : index
    %c0_15 = arith.constant 0 : index
    %c0_16 = arith.constant 0 : index
    %27 = vector.load %arg5[%c0_14, %c0_15, %c0_16] : memref<2x1x96xf32, #tpu.memory_space<vmem>>, vector<1x1x96xf32>
    %28 = vector.shape_cast %27 : vector<1x1x96xf32> to vector<1x96xf32>
    %29 = vector.broadcast %28 : vector<1x96xf32> to vector<8x96xf32>
    %30 = arith.addf %26, %29 : vector<8x96xf32>
    %c0_17 = arith.constant 0 : index
    %c0_18 = arith.constant 0 : index
    %c0_19 = arith.constant 0 : index
    %31 = vector.load %arg6[%c0_17, %c0_18, %c0_19] : memref<2x32x32xf32, #tpu.memory_space<vmem>>, vector<1x32x32xf32>
    %32 = vector.shape_cast %31 : vector<1x32x32xf32> to vector<32x32xf32>
    %c0_20 = arith.constant 0 : index
    %c0_21 = arith.constant 0 : index
    %c0_22 = arith.constant 0 : index
    %33 = vector.load %arg7[%c0_20, %c0_21, %c0_22] : memref<2x1x32xf32, #tpu.memory_space<vmem>>, vector<1x1x32xf32>
    %34 = vector.shape_cast %33 : vector<1x1x32xf32> to vector<1x32xf32>
    %35 = vector.extract_strided_slice %30 {offsets = [0, 0], sizes = [8, 8], strides = [1, 1]} : vector<8x96xf32> to vector<8x8xf32>
    %36 = vector.extract_strided_slice %30 {offsets = [0, 32], sizes = [8, 8], strides = [1, 1]} : vector<8x96xf32> to vector<8x8xf32>
    %37 = vector.extract_strided_slice %30 {offsets = [0, 64], sizes = [8, 8], strides = [1, 1]} : vector<8x96xf32> to vector<8x8xf32>
    %cst_23 = arith.constant dense<0.000000e+00> : vector<8x8xf32>
    %38 = tpu.matmul %35, %36, %cst_23 {dimension_numbers = #tpu.dot_dimension_numbers<[1], [1], [0], [0], [0, 0, 1, 0], [], []>} : vector<8x8xf32>, vector<8x8xf32>, vector<8x8xf32> -> vector<8x8xf32>
    %cst_24 = arith.constant 0.353553385 : f32
    %39 = vector.broadcast %cst_24 : f32 to vector<8x8xf32>
    %40 = arith.mulf %38, %39 : vector<8x8xf32>
    %cst_25 = arith.constant dense<0xFF800000> : vector<8xf32>
    %41 = vector.multi_reduction <maximumf>, %40, %cst_25 [1] : vector<8x8xf32> to vector<8xf32>
    %42 = vector.shape_cast %41 : vector<8xf32> to vector<8x1xf32>
    %43 = vector.broadcast %42 : vector<8x1xf32> to vector<8x8xf32>
    %44 = arith.subf %40, %43 : vector<8x8xf32>
    %45 = math.exp %44 : vector<8x8xf32>
    %cst_26 = arith.constant dense<0.000000e+00> : vector<8xf32>
    %46 = vector.multi_reduction <add>, %45, %cst_26 [1] : vector<8x8xf32> to vector<8xf32>
    %47 = vector.shape_cast %46 : vector<8xf32> to vector<8x1xf32>
    %48 = tpu.reciprocal %47 {approx = true} : vector<8x1xf32> -> vector<8x1xf32>
    %49 = vector.broadcast %48 : vector<8x1xf32> to vector<8x8xf32>
    %50 = arith.mulf %45, %49 : vector<8x8xf32>
    %cst_27 = arith.constant dense<0.000000e+00> : vector<8x8xf32>
    %51 = tpu.matmul %50, %37, %cst_27 {dimension_numbers = #tpu.dot_dimension_numbers<[1], [0], [0], [1], [0, 0, 1, 1], [], []>} : vector<8x8xf32>, vector<8x8xf32>, vector<8x8xf32> -> vector<8x8xf32>
    %52 = vector.extract_strided_slice %32 {offsets = [0, 0], sizes = [8, 32], strides = [1, 1]} : vector<32x32xf32> to vector<8x32xf32>
    %cst_28 = arith.constant dense<0.000000e+00> : vector<8x32xf32>
    %53 = tpu.matmul %51, %52, %cst_28 {dimension_numbers = #tpu.dot_dimension_numbers<[1], [0], [0], [1], [0, 0, 1, 1], [], []>} : vector<8x8xf32>, vector<8x32xf32>, vector<8x32xf32> -> vector<8x32xf32>
    %54 = vector.broadcast %34 : vector<1x32xf32> to vector<8x32xf32>
    %55 = arith.addf %54, %53 : vector<8x32xf32>
    %56 = vector.extract_strided_slice %30 {offsets = [0, 8], sizes = [8, 8], strides = [1, 1]} : vector<8x96xf32> to vector<8x8xf32>
    %57 = vector.extract_strided_slice %30 {offsets = [0, 40], sizes = [8, 8], strides = [1, 1]} : vector<8x96xf32> to vector<8x8xf32>
    %58 = vector.extract_strided_slice %30 {offsets = [0, 72], sizes = [8, 8], strides = [1, 1]} : vector<8x96xf32> to vector<8x8xf32>
    %cst_29 = arith.constant dense<0.000000e+00> : vector<8x8xf32>
    %59 = tpu.matmul %56, %57, %cst_29 {dimension_numbers = #tpu.dot_dimension_numbers<[1], [1], [0], [0], [0, 0, 1, 0], [], []>} : vector<8x8xf32>, vector<8x8xf32>, vector<8x8xf32> -> vector<8x8xf32>
    %cst_30 = arith.constant 0.353553385 : f32
    %60 = vector.broadcast %cst_30 : f32 to vector<8x8xf32>
    %61 = arith.mulf %59, %60 : vector<8x8xf32>
    %cst_31 = arith.constant dense<0xFF800000> : vector<8xf32>
    %62 = vector.multi_reduction <maximumf>, %61, %cst_31 [1] : vector<8x8xf32> to vector<8xf32>
    %63 = vector.shape_cast %62 : vector<8xf32> to vector<8x1xf32>
    %64 = vector.broadcast %63 : vector<8x1xf32> to vector<8x8xf32>
    %65 = arith.subf %61, %64 : vector<8x8xf32>
    %66 = math.exp %65 : vector<8x8xf32>
    %cst_32 = arith.constant dense<0.000000e+00> : vector<8xf32>
    %67 = vector.multi_reduction <add>, %66, %cst_32 [1] : vector<8x8xf32> to vector<8xf32>
    %68 = vector.shape_cast %67 : vector<8xf32> to vector<8x1xf32>
    %69 = tpu.reciprocal %68 {approx = true} : vector<8x1xf32> -> vector<8x1xf32>
    %70 = vector.broadcast %69 : vector<8x1xf32> to vector<8x8xf32>
    %71 = arith.mulf %66, %70 : vector<8x8xf32>
    %cst_33 = arith.constant dense<0.000000e+00> : vector<8x8xf32>
    %72 = tpu.matmul %71, %58, %cst_33 {dimension_numbers = #tpu.dot_dimension_numbers<[1], [0], [0], [1], [0, 0, 1, 1], [], []>} : vector<8x8xf32>, vector<8x8xf32>, vector<8x8xf32> -> vector<8x8xf32>
    %73 = vector.extract_strided_slice %32 {offsets = [8, 0], sizes = [8, 32], strides = [1, 1]} : vector<32x32xf32> to vector<8x32xf32>
    %cst_34 = arith.constant dense<0.000000e+00> : vector<8x32xf32>
    %74 = tpu.matmul %72, %73, %cst_34 {dimension_numbers = #tpu.dot_dimension_numbers<[1], [0], [0], [1], [0, 0, 1, 1], [], []>} : vector<8x8xf32>, vector<8x32xf32>, vector<8x32xf32> -> vector<8x32xf32>
    %75 = arith.addf %55, %74 : vector<8x32xf32>
    %76 = vector.extract_strided_slice %30 {offsets = [0, 16], sizes = [8, 8], strides = [1, 1]} : vector<8x96xf32> to vector<8x8xf32>
    %77 = vector.extract_strided_slice %30 {offsets = [0, 48], sizes = [8, 8], strides = [1, 1]} : vector<8x96xf32> to vector<8x8xf32>
    %78 = vector.extract_strided_slice %30 {offsets = [0, 80], sizes = [8, 8], strides = [1, 1]} : vector<8x96xf32> to vector<8x8xf32>
    %cst_35 = arith.constant dense<0.000000e+00> : vector<8x8xf32>
    %79 = tpu.matmul %76, %77, %cst_35 {dimension_numbers = #tpu.dot_dimension_numbers<[1], [1], [0], [0], [0, 0, 1, 0], [], []>} : vector<8x8xf32>, vector<8x8xf32>, vector<8x8xf32> -> vector<8x8xf32>
    %cst_36 = arith.constant 0.353553385 : f32
    %80 = vector.broadcast %cst_36 : f32 to vector<8x8xf32>
    %81 = arith.mulf %79, %80 : vector<8x8xf32>
    %cst_37 = arith.constant dense<0xFF800000> : vector<8xf32>
    %82 = vector.multi_reduction <maximumf>, %81, %cst_37 [1] : vector<8x8xf32> to vector<8xf32>
    %83 = vector.shape_cast %82 : vector<8xf32> to vector<8x1xf32>
    %84 = vector.broadcast %83 : vector<8x1xf32> to vector<8x8xf32>
    %85 = arith.subf %81, %84 : vector<8x8xf32>
    %86 = math.exp %85 : vector<8x8xf32>
    %cst_38 = arith.constant dense<0.000000e+00> : vector<8xf32>
    %87 = vector.multi_reduction <add>, %86, %cst_38 [1] : vector<8x8xf32> to vector<8xf32>
    %88 = vector.shape_cast %87 : vector<8xf32> to vector<8x1xf32>
    %89 = tpu.reciprocal %88 {approx = true} : vector<8x1xf32> -> vector<8x1xf32>
    %90 = vector.broadcast %89 : vector<8x1xf32> to vector<8x8xf32>
    %91 = arith.mulf %86, %90 : vector<8x8xf32>
    %cst_39 = arith.constant dense<0.000000e+00> : vector<8x8xf32>
    %92 = tpu.matmul %91, %78, %cst_39 {dimension_numbers = #tpu.dot_dimension_numbers<[1], [0], [0], [1], [0, 0, 1, 1], [], []>} : vector<8x8xf32>, vector<8x8xf32>, vector<8x8xf32> -> vector<8x8xf32>
    %93 = vector.extract_strided_slice %32 {offsets = [16, 0], sizes = [8, 32], strides = [1, 1]} : vector<32x32xf32> to vector<8x32xf32>
    %cst_40 = arith.constant dense<0.000000e+00> : vector<8x32xf32>
    %94 = tpu.matmul %92, %93, %cst_40 {dimension_numbers = #tpu.dot_dimension_numbers<[1], [0], [0], [1], [0, 0, 1, 1], [], []>} : vector<8x8xf32>, vector<8x32xf32>, vector<8x32xf32> -> vector<8x32xf32>
    %95 = arith.addf %75, %94 : vector<8x32xf32>
    %96 = vector.extract_strided_slice %30 {offsets = [0, 24], sizes = [8, 8], strides = [1, 1]} : vector<8x96xf32> to vector<8x8xf32>
    %97 = vector.extract_strided_slice %30 {offsets = [0, 56], sizes = [8, 8], strides = [1, 1]} : vector<8x96xf32> to vector<8x8xf32>
    %98 = vector.extract_strided_slice %30 {offsets = [0, 88], sizes = [8, 8], strides = [1, 1]} : vector<8x96xf32> to vector<8x8xf32>
    %cst_41 = arith.constant dense<0.000000e+00> : vector<8x8xf32>
    %99 = tpu.matmul %96, %97, %cst_41 {dimension_numbers = #tpu.dot_dimension_numbers<[1], [1], [0], [0], [0, 0, 1, 0], [], []>} : vector<8x8xf32>, vector<8x8xf32>, vector<8x8xf32> -> vector<8x8xf32>
    %cst_42 = arith.constant 0.353553385 : f32
    %100 = vector.broadcast %cst_42 : f32 to vector<8x8xf32>
    %101 = arith.mulf %99, %100 : vector<8x8xf32>
    %cst_43 = arith.constant dense<0xFF800000> : vector<8xf32>
    %102 = vector.multi_reduction <maximumf>, %101, %cst_43 [1] : vector<8x8xf32> to vector<8xf32>
    %103 = vector.shape_cast %102 : vector<8xf32> to vector<8x1xf32>
    %104 = vector.broadcast %103 : vector<8x1xf32> to vector<8x8xf32>
    %105 = arith.subf %101, %104 : vector<8x8xf32>
    %106 = math.exp %105 : vector<8x8xf32>
    %cst_44 = arith.constant dense<0.000000e+00> : vector<8xf32>
    %107 = vector.multi_reduction <add>, %106, %cst_44 [1] : vector<8x8xf32> to vector<8xf32>
    %108 = vector.shape_cast %107 : vector<8xf32> to vector<8x1xf32>
    %109 = tpu.reciprocal %108 {approx = true} : vector<8x1xf32> -> vector<8x1xf32>
    %110 = vector.broadcast %109 : vector<8x1xf32> to vector<8x8xf32>
    %111 = arith.mulf %106, %110 : vector<8x8xf32>
    %cst_45 = arith.constant dense<0.000000e+00> : vector<8x8xf32>
    %112 = tpu.matmul %111, %98, %cst_45 {dimension_numbers = #tpu.dot_dimension_numbers<[1], [0], [0], [1], [0, 0, 1, 1], [], []>} : vector<8x8xf32>, vector<8x8xf32>, vector<8x8xf32> -> vector<8x8xf32>
    %113 = vector.extract_strided_slice %32 {offsets = [24, 0], sizes = [8, 32], strides = [1, 1]} : vector<32x32xf32> to vector<8x32xf32>
    %cst_46 = arith.constant dense<0.000000e+00> : vector<8x32xf32>
    %114 = tpu.matmul %112, %113, %cst_46 {dimension_numbers = #tpu.dot_dimension_numbers<[1], [0], [0], [1], [0, 0, 1, 1], [], []>} : vector<8x8xf32>, vector<8x32xf32>, vector<8x32xf32> -> vector<8x32xf32>
    %115 = arith.addf %95, %114 : vector<8x32xf32>
    %116 = arith.addf %115, %23 : vector<8x32xf32>
    %c0_47 = arith.constant 0 : index
    %c0_48 = arith.constant 0 : index
    %c0_49 = arith.constant 0 : index
    %117 = vector.load %arg8[%c0_47, %c0_48, %c0_49] : memref<2x1x32xf32, #tpu.memory_space<vmem>>, vector<1x1x32xf32>
    %118 = vector.shape_cast %117 : vector<1x1x32xf32> to vector<1x32xf32>
    %c0_50 = arith.constant 0 : index
    %c0_51 = arith.constant 0 : index
    %c0_52 = arith.constant 0 : index
    %119 = vector.load %arg9[%c0_50, %c0_51, %c0_52] : memref<2x1x32xf32, #tpu.memory_space<vmem>>, vector<1x1x32xf32>
    %120 = vector.shape_cast %119 : vector<1x1x32xf32> to vector<1x32xf32>
    %cst_53 = arith.constant dense<0.000000e+00> : vector<8xf32>
    %121 = vector.multi_reduction <add>, %116, %cst_53 [1] : vector<8x32xf32> to vector<8xf32>
    %122 = vector.shape_cast %121 : vector<8xf32> to vector<8x1xf32>
    %cst_54 = arith.constant 3.200000e+01 : f32
    %123 = vector.broadcast %cst_54 : f32 to vector<8x1xf32>
    %124 = arith.divf %122, %123 : vector<8x1xf32>
    %125 = vector.broadcast %124 : vector<8x1xf32> to vector<8x32xf32>
    %126 = arith.subf %116, %125 : vector<8x32xf32>
    %127 = arith.mulf %126, %126 : vector<8x32xf32>
    %cst_55 = arith.constant dense<0.000000e+00> : vector<8xf32>
    %128 = vector.multi_reduction <add>, %127, %cst_55 [1] : vector<8x32xf32> to vector<8xf32>
    %129 = vector.shape_cast %128 : vector<8xf32> to vector<8x1xf32>
    %cst_56 = arith.constant 3.200000e+01 : f32
    %130 = vector.broadcast %cst_56 : f32 to vector<8x1xf32>
    %131 = arith.divf %129, %130 : vector<8x1xf32>
    %cst_57 = arith.constant 9.99999996E-13 : f32
    %132 = vector.broadcast %cst_57 : f32 to vector<8x1xf32>
    %133 = arith.addf %131, %132 : vector<8x1xf32>
    %134 = math.rsqrt %133 : vector<8x1xf32>
    %135 = vector.broadcast %134 : vector<8x1xf32> to vector<8x32xf32>
    %136 = arith.mulf %126, %135 : vector<8x32xf32>
    %137 = vector.broadcast %118 : vector<1x32xf32> to vector<8x32xf32>
    %138 = arith.mulf %136, %137 : vector<8x32xf32>
    %139 = vector.broadcast %120 : vector<1x32xf32> to vector<8x32xf32>
    %140 = arith.addf %138, %139 : vector<8x32xf32>
    %c0_58 = arith.constant 0 : index
    %c0_59 = arith.constant 0 : index
    %c0_60 = arith.constant 0 : index
    %141 = vector.load %arg10[%c0_58, %c0_59, %c0_60] : memref<2x32x64xf32, #tpu.memory_space<vmem>>, vector<1x32x64xf32>
    %142 = vector.shape_cast %141 : vector<1x32x64xf32> to vector<32x64xf32>
    %cst_61 = arith.constant dense<0.000000e+00> : vector<8x64xf32>
    %143 = tpu.matmul %140, %142, %cst_61 {dimension_numbers = #tpu.dot_dimension_numbers<[1], [0], [0], [1], [0, 0, 1, 1], [], []>} : vector<8x32xf32>, vector<32x64xf32>, vector<8x64xf32> -> vector<8x64xf32>
    %c0_62 = arith.constant 0 : index
    %c0_63 = arith.constant 0 : index
    %c0_64 = arith.constant 0 : index
    %144 = vector.load %arg11[%c0_62, %c0_63, %c0_64] : memref<2x1x64xf32, #tpu.memory_space<vmem>>, vector<1x1x64xf32>
    %145 = vector.shape_cast %144 : vector<1x1x64xf32> to vector<1x64xf32>
    %146 = vector.broadcast %145 : vector<1x64xf32> to vector<8x64xf32>
    %147 = arith.addf %143, %146 : vector<8x64xf32>
    %cst_65 = arith.constant 5.000000e-01 : f32
    %148 = vector.broadcast %cst_65 : f32 to vector<8x64xf32>
    %149 = arith.mulf %148, %147 : vector<8x64xf32>
    %cst_66 = arith.constant 4.471500e-02 : f32
    %150 = vector.broadcast %cst_66 : f32 to vector<8x64xf32>
    %151 = arith.mulf %150, %147 : vector<8x64xf32>
    %152 = arith.mulf %151, %147 : vector<8x64xf32>
    %153 = arith.mulf %152, %147 : vector<8x64xf32>
    %154 = arith.addf %147, %153 : vector<8x64xf32>
    %cst_67 = arith.constant 0.797884583 : f32
    %155 = vector.broadcast %cst_67 : f32 to vector<8x64xf32>
    %156 = arith.mulf %155, %154 : vector<8x64xf32>
    %157 = math.tanh %156 : vector<8x64xf32>
    %cst_68 = arith.constant 1.000000e+00 : f32
    %158 = vector.broadcast %cst_68 : f32 to vector<8x64xf32>
    %159 = arith.addf %158, %157 : vector<8x64xf32>
    %160 = arith.mulf %149, %159 : vector<8x64xf32>
    %c0_69 = arith.constant 0 : index
    %c0_70 = arith.constant 0 : index
    %c0_71 = arith.constant 0 : index
    %161 = vector.load %arg12[%c0_69, %c0_70, %c0_71] : memref<2x64x32xf32, #tpu.memory_space<vmem>>, vector<1x64x32xf32>
    %162 = vector.shape_cast %161 : vector<1x64x32xf32> to vector<64x32xf32>
    %cst_72 = arith.constant dense<0.000000e+00> : vector<8x32xf32>
    %163 = tpu.matmul %160, %162, %cst_72 {dimension_numbers = #tpu.dot_dimension_numbers<[1], [0], [0], [1], [0, 0, 1, 1], [], []>} : vector<8x64xf32>, vector<64x32xf32>, vector<8x32xf32> -> vector<8x32xf32>
    %c0_73 = arith.constant 0 : index
    %c0_74 = arith.constant 0 : index
    %c0_75 = arith.constant 0 : index
    %164 = vector.load %arg13[%c0_73, %c0_74, %c0_75] : memref<2x1x32xf32, #tpu.memory_space<vmem>>, vector<1x1x32xf32>
    %165 = vector.shape_cast %164 : vector<1x1x32xf32> to vector<1x32xf32>
    %166 = vector.broadcast %165 : vector<1x32xf32> to vector<8x32xf32>
    %167 = arith.addf %163, %166 : vector<8x32xf32>
    %168 = arith.addf %167, %140 : vector<8x32xf32>
    %c0_76 = arith.constant 0 : index
    %c0_77 = arith.constant 0 : index
    %c0_78 = arith.constant 0 : index
    %169 = vector.load %arg14[%c0_76, %c0_77, %c0_78] : memref<2x1x32xf32, #tpu.memory_space<vmem>>, vector<1x1x32xf32>
    %170 = vector.shape_cast %169 : vector<1x1x32xf32> to vector<1x32xf32>
    %c0_79 = arith.constant 0 : index
    %c0_80 = arith.constant 0 : index
    %c0_81 = arith.constant 0 : index
    %171 = vector.load %arg15[%c0_79, %c0_80, %c0_81] : memref<2x1x32xf32, #tpu.memory_space<vmem>>, vector<1x1x32xf32>
    %172 = vector.shape_cast %171 : vector<1x1x32xf32> to vector<1x32xf32>
    %cst_82 = arith.constant dense<0.000000e+00> : vector<8xf32>
    %173 = vector.multi_reduction <add>, %168, %cst_82 [1] : vector<8x32xf32> to vector<8xf32>
    %174 = vector.shape_cast %173 : vector<8xf32> to vector<8x1xf32>
    %cst_83 = arith.constant 3.200000e+01 : f32
    %175 = vector.broadcast %cst_83 : f32 to vector<8x1xf32>
    %176 = arith.divf %174, %175 : vector<8x1xf32>
    %177 = vector.broadcast %176 : vector<8x1xf32> to vector<8x32xf32>
    %178 = arith.subf %168, %177 : vector<8x32xf32>
    %179 = arith.mulf %178, %178 : vector<8x32xf32>
    %cst_84 = arith.constant dense<0.000000e+00> : vector<8xf32>
    %180 = vector.multi_reduction <add>, %179, %cst_84 [1] : vector<8x32xf32> to vector<8xf32>
    %181 = vector.shape_cast %180 : vector<8xf32> to vector<8x1xf32>
    %cst_85 = arith.constant 3.200000e+01 : f32
    %182 = vector.broadcast %cst_85 : f32 to vector<8x1xf32>
    %183 = arith.divf %181, %182 : vector<8x1xf32>
    %cst_86 = arith.constant 9.99999996E-13 : f32
    %184 = vector.broadcast %cst_86 : f32 to vector<8x1xf32>
    %185 = arith.addf %183, %184 : vector<8x1xf32>
    %186 = math.rsqrt %185 : vector<8x1xf32>
    %187 = vector.broadcast %186 : vector<8x1xf32> to vector<8x32xf32>
    %188 = arith.mulf %178, %187 : vector<8x32xf32>
    %189 = vector.broadcast %170 : vector<1x32xf32> to vector<8x32xf32>
    %190 = arith.mulf %188, %189 : vector<8x32xf32>
    %191 = vector.broadcast %172 : vector<1x32xf32> to vector<8x32xf32>
    %192 = arith.addf %190, %191 : vector<8x32xf32>
    %c1 = arith.constant 1 : index
    %c0_87 = arith.constant 0 : index
    %c0_88 = arith.constant 0 : index
    %193 = vector.load %arg4[%c1, %c0_87, %c0_88] : memref<2x32x96xf32, #tpu.memory_space<vmem>>, vector<1x32x96xf32>
    %194 = vector.shape_cast %193 : vector<1x32x96xf32> to vector<32x96xf32>
    %cst_89 = arith.constant dense<0.000000e+00> : vector<8x96xf32>
    %195 = tpu.matmul %192, %194, %cst_89 {dimension_numbers = #tpu.dot_dimension_numbers<[1], [0], [0], [1], [0, 0, 1, 1], [], []>} : vector<8x32xf32>, vector<32x96xf32>, vector<8x96xf32> -> vector<8x96xf32>
    %c1_90 = arith.constant 1 : index
    %c0_91 = arith.constant 0 : index
    %c0_92 = arith.constant 0 : index
    %196 = vector.load %arg5[%c1_90, %c0_91, %c0_92] : memref<2x1x96xf32, #tpu.memory_space<vmem>>, vector<1x1x96xf32>
    %197 = vector.shape_cast %196 : vector<1x1x96xf32> to vector<1x96xf32>
    %198 = vector.broadcast %197 : vector<1x96xf32> to vector<8x96xf32>
    %199 = arith.addf %195, %198 : vector<8x96xf32>
    %c1_93 = arith.constant 1 : index
    %c0_94 = arith.constant 0 : index
    %c0_95 = arith.constant 0 : index
    %200 = vector.load %arg6[%c1_93, %c0_94, %c0_95] : memref<2x32x32xf32, #tpu.memory_space<vmem>>, vector<1x32x32xf32>
    %201 = vector.shape_cast %200 : vector<1x32x32xf32> to vector<32x32xf32>
    %c1_96 = arith.constant 1 : index
    %c0_97 = arith.constant 0 : index
    %c0_98 = arith.constant 0 : index
    %202 = vector.load %arg7[%c1_96, %c0_97, %c0_98] : memref<2x1x32xf32, #tpu.memory_space<vmem>>, vector<1x1x32xf32>
    %203 = vector.shape_cast %202 : vector<1x1x32xf32> to vector<1x32xf32>
    %204 = vector.extract_strided_slice %199 {offsets = [0, 0], sizes = [8, 8], strides = [1, 1]} : vector<8x96xf32> to vector<8x8xf32>
    %205 = vector.extract_strided_slice %199 {offsets = [0, 32], sizes = [8, 8], strides = [1, 1]} : vector<8x96xf32> to vector<8x8xf32>
    %206 = vector.extract_strided_slice %199 {offsets = [0, 64], sizes = [8, 8], strides = [1, 1]} : vector<8x96xf32> to vector<8x8xf32>
    %cst_99 = arith.constant dense<0.000000e+00> : vector<8x8xf32>
    %207 = tpu.matmul %204, %205, %cst_99 {dimension_numbers = #tpu.dot_dimension_numbers<[1], [1], [0], [0], [0, 0, 1, 0], [], []>} : vector<8x8xf32>, vector<8x8xf32>, vector<8x8xf32> -> vector<8x8xf32>
    %cst_100 = arith.constant 0.353553385 : f32
    %208 = vector.broadcast %cst_100 : f32 to vector<8x8xf32>
    %209 = arith.mulf %207, %208 : vector<8x8xf32>
    %cst_101 = arith.constant dense<0xFF800000> : vector<8xf32>
    %210 = vector.multi_reduction <maximumf>, %209, %cst_101 [1] : vector<8x8xf32> to vector<8xf32>
    %211 = vector.shape_cast %210 : vector<8xf32> to vector<8x1xf32>
    %212 = vector.broadcast %211 : vector<8x1xf32> to vector<8x8xf32>
    %213 = arith.subf %209, %212 : vector<8x8xf32>
    %214 = math.exp %213 : vector<8x8xf32>
    %cst_102 = arith.constant dense<0.000000e+00> : vector<8xf32>
    %215 = vector.multi_reduction <add>, %214, %cst_102 [1] : vector<8x8xf32> to vector<8xf32>
    %216 = vector.shape_cast %215 : vector<8xf32> to vector<8x1xf32>
    %217 = tpu.reciprocal %216 {approx = true} : vector<8x1xf32> -> vector<8x1xf32>
    %218 = vector.broadcast %217 : vector<8x1xf32> to vector<8x8xf32>
    %219 = arith.mulf %214, %218 : vector<8x8xf32>
    %cst_103 = arith.constant dense<0.000000e+00> : vector<8x8xf32>
    %220 = tpu.matmul %219, %206, %cst_103 {dimension_numbers = #tpu.dot_dimension_numbers<[1], [0], [0], [1], [0, 0, 1, 1], [], []>} : vector<8x8xf32>, vector<8x8xf32>, vector<8x8xf32> -> vector<8x8xf32>
    %221 = vector.extract_strided_slice %201 {offsets = [0, 0], sizes = [8, 32], strides = [1, 1]} : vector<32x32xf32> to vector<8x32xf32>
    %cst_104 = arith.constant dense<0.000000e+00> : vector<8x32xf32>
    %222 = tpu.matmul %220, %221, %cst_104 {dimension_numbers = #tpu.dot_dimension_numbers<[1], [0], [0], [1], [0, 0, 1, 1], [], []>} : vector<8x8xf32>, vector<8x32xf32>, vector<8x32xf32> -> vector<8x32xf32>
    %223 = vector.broadcast %203 : vector<1x32xf32> to vector<8x32xf32>
    %224 = arith.addf %223, %222 : vector<8x32xf32>
    %225 = vector.extract_strided_slice %199 {offsets = [0, 8], sizes = [8, 8], strides = [1, 1]} : vector<8x96xf32> to vector<8x8xf32>
    %226 = vector.extract_strided_slice %199 {offsets = [0, 40], sizes = [8, 8], strides = [1, 1]} : vector<8x96xf32> to vector<8x8xf32>
    %227 = vector.extract_strided_slice %199 {offsets = [0, 72], sizes = [8, 8], strides = [1, 1]} : vector<8x96xf32> to vector<8x8xf32>
    %cst_105 = arith.constant dense<0.000000e+00> : vector<8x8xf32>
    %228 = tpu.matmul %225, %226, %cst_105 {dimension_numbers = #tpu.dot_dimension_numbers<[1], [1], [0], [0], [0, 0, 1, 0], [], []>} : vector<8x8xf32>, vector<8x8xf32>, vector<8x8xf32> -> vector<8x8xf32>
    %cst_106 = arith.constant 0.353553385 : f32
    %229 = vector.broadcast %cst_106 : f32 to vector<8x8xf32>
    %230 = arith.mulf %228, %229 : vector<8x8xf32>
    %cst_107 = arith.constant dense<0xFF800000> : vector<8xf32>
    %231 = vector.multi_reduction <maximumf>, %230, %cst_107 [1] : vector<8x8xf32> to vector<8xf32>
    %232 = vector.shape_cast %231 : vector<8xf32> to vector<8x1xf32>
    %233 = vector.broadcast %232 : vector<8x1xf32> to vector<8x8xf32>
    %234 = arith.subf %230, %233 : vector<8x8xf32>
    %235 = math.exp %234 : vector<8x8xf32>
    %cst_108 = arith.constant dense<0.000000e+00> : vector<8xf32>
    %236 = vector.multi_reduction <add>, %235, %cst_108 [1] : vector<8x8xf32> to vector<8xf32>
    %237 = vector.shape_cast %236 : vector<8xf32> to vector<8x1xf32>
    %238 = tpu.reciprocal %237 {approx = true} : vector<8x1xf32> -> vector<8x1xf32>
    %239 = vector.broadcast %238 : vector<8x1xf32> to vector<8x8xf32>
    %240 = arith.mulf %235, %239 : vector<8x8xf32>
    %cst_109 = arith.constant dense<0.000000e+00> : vector<8x8xf32>
    %241 = tpu.matmul %240, %227, %cst_109 {dimension_numbers = #tpu.dot_dimension_numbers<[1], [0], [0], [1], [0, 0, 1, 1], [], []>} : vector<8x8xf32>, vector<8x8xf32>, vector<8x8xf32> -> vector<8x8xf32>
    %242 = vector.extract_strided_slice %201 {offsets = [8, 0], sizes = [8, 32], strides = [1, 1]} : vector<32x32xf32> to vector<8x32xf32>
    %cst_110 = arith.constant dense<0.000000e+00> : vector<8x32xf32>
    %243 = tpu.matmul %241, %242, %cst_110 {dimension_numbers = #tpu.dot_dimension_numbers<[1], [0], [0], [1], [0, 0, 1, 1], [], []>} : vector<8x8xf32>, vector<8x32xf32>, vector<8x32xf32> -> vector<8x32xf32>
    %244 = arith.addf %224, %243 : vector<8x32xf32>
    %245 = vector.extract_strided_slice %199 {offsets = [0, 16], sizes = [8, 8], strides = [1, 1]} : vector<8x96xf32> to vector<8x8xf32>
    %246 = vector.extract_strided_slice %199 {offsets = [0, 48], sizes = [8, 8], strides = [1, 1]} : vector<8x96xf32> to vector<8x8xf32>
    %247 = vector.extract_strided_slice %199 {offsets = [0, 80], sizes = [8, 8], strides = [1, 1]} : vector<8x96xf32> to vector<8x8xf32>
    %cst_111 = arith.constant dense<0.000000e+00> : vector<8x8xf32>
    %248 = tpu.matmul %245, %246, %cst_111 {dimension_numbers = #tpu.dot_dimension_numbers<[1], [1], [0], [0], [0, 0, 1, 0], [], []>} : vector<8x8xf32>, vector<8x8xf32>, vector<8x8xf32> -> vector<8x8xf32>
    %cst_112 = arith.constant 0.353553385 : f32
    %249 = vector.broadcast %cst_112 : f32 to vector<8x8xf32>
    %250 = arith.mulf %248, %249 : vector<8x8xf32>
    %cst_113 = arith.constant dense<0xFF800000> : vector<8xf32>
    %251 = vector.multi_reduction <maximumf>, %250, %cst_113 [1] : vector<8x8xf32> to vector<8xf32>
    %252 = vector.shape_cast %251 : vector<8xf32> to vector<8x1xf32>
    %253 = vector.broadcast %252 : vector<8x1xf32> to vector<8x8xf32>
    %254 = arith.subf %250, %253 : vector<8x8xf32>
    %255 = math.exp %254 : vector<8x8xf32>
    %cst_114 = arith.constant dense<0.000000e+00> : vector<8xf32>
    %256 = vector.multi_reduction <add>, %255, %cst_114 [1] : vector<8x8xf32> to vector<8xf32>
    %257 = vector.shape_cast %256 : vector<8xf32> to vector<8x1xf32>
    %258 = tpu.reciprocal %257 {approx = true} : vector<8x1xf32> -> vector<8x1xf32>
    %259 = vector.broadcast %258 : vector<8x1xf32> to vector<8x8xf32>
    %260 = arith.mulf %255, %259 : vector<8x8xf32>
    %cst_115 = arith.constant dense<0.000000e+00> : vector<8x8xf32>
    %261 = tpu.matmul %260, %247, %cst_115 {dimension_numbers = #tpu.dot_dimension_numbers<[1], [0], [0], [1], [0, 0, 1, 1], [], []>} : vector<8x8xf32>, vector<8x8xf32>, vector<8x8xf32> -> vector<8x8xf32>
    %262 = vector.extract_strided_slice %201 {offsets = [16, 0], sizes = [8, 32], strides = [1, 1]} : vector<32x32xf32> to vector<8x32xf32>
    %cst_116 = arith.constant dense<0.000000e+00> : vector<8x32xf32>
    %263 = tpu.matmul %261, %262, %cst_116 {dimension_numbers = #tpu.dot_dimension_numbers<[1], [0], [0], [1], [0, 0, 1, 1], [], []>} : vector<8x8xf32>, vector<8x32xf32>, vector<8x32xf32> -> vector<8x32xf32>
    %264 = arith.addf %244, %263 : vector<8x32xf32>
    %265 = vector.extract_strided_slice %199 {offsets = [0, 24], sizes = [8, 8], strides = [1, 1]} : vector<8x96xf32> to vector<8x8xf32>
    %266 = vector.extract_strided_slice %199 {offsets = [0, 56], sizes = [8, 8], strides = [1, 1]} : vector<8x96xf32> to vector<8x8xf32>
    %267 = vector.extract_strided_slice %199 {offsets = [0, 88], sizes = [8, 8], strides = [1, 1]} : vector<8x96xf32> to vector<8x8xf32>
    %cst_117 = arith.constant dense<0.000000e+00> : vector<8x8xf32>
    %268 = tpu.matmul %265, %266, %cst_117 {dimension_numbers = #tpu.dot_dimension_numbers<[1], [1], [0], [0], [0, 0, 1, 0], [], []>} : vector<8x8xf32>, vector<8x8xf32>, vector<8x8xf32> -> vector<8x8xf32>
    %cst_118 = arith.constant 0.353553385 : f32
    %269 = vector.broadcast %cst_118 : f32 to vector<8x8xf32>
    %270 = arith.mulf %268, %269 : vector<8x8xf32>
    %cst_119 = arith.constant dense<0xFF800000> : vector<8xf32>
    %271 = vector.multi_reduction <maximumf>, %270, %cst_119 [1] : vector<8x8xf32> to vector<8xf32>
    %272 = vector.shape_cast %271 : vector<8xf32> to vector<8x1xf32>
    %273 = vector.broadcast %272 : vector<8x1xf32> to vector<8x8xf32>
    %274 = arith.subf %270, %273 : vector<8x8xf32>
    %275 = math.exp %274 : vector<8x8xf32>
    %cst_120 = arith.constant dense<0.000000e+00> : vector<8xf32>
    %276 = vector.multi_reduction <add>, %275, %cst_120 [1] : vector<8x8xf32> to vector<8xf32>
    %277 = vector.shape_cast %276 : vector<8xf32> to vector<8x1xf32>
    %278 = tpu.reciprocal %277 {approx = true} : vector<8x1xf32> -> vector<8x1xf32>
    %279 = vector.broadcast %278 : vector<8x1xf32> to vector<8x8xf32>
    %280 = arith.mulf %275, %279 : vector<8x8xf32>
    %cst_121 = arith.constant dense<0.000000e+00> : vector<8x8xf32>
    %281 = tpu.matmul %280, %267, %cst_121 {dimension_numbers = #tpu.dot_dimension_numbers<[1], [0], [0], [1], [0, 0, 1, 1], [], []>} : vector<8x8xf32>, vector<8x8xf32>, vector<8x8xf32> -> vector<8x8xf32>
    %282 = vector.extract_strided_slice %201 {offsets = [24, 0], sizes = [8, 32], strides = [1, 1]} : vector<32x32xf32> to vector<8x32xf32>
    %cst_122 = arith.constant dense<0.000000e+00> : vector<8x32xf32>
    %283 = tpu.matmul %281, %282, %cst_122 {dimension_numbers = #tpu.dot_dimension_numbers<[1], [0], [0], [1], [0, 0, 1, 1], [], []>} : vector<8x8xf32>, vector<8x32xf32>, vector<8x32xf32> -> vector<8x32xf32>
    %284 = arith.addf %264, %283 : vector<8x32xf32>
    %285 = arith.addf %284, %192 : vector<8x32xf32>
    %c1_123 = arith.constant 1 : index
    %c0_124 = arith.constant 0 : index
    %c0_125 = arith.constant 0 : index
    %286 = vector.load %arg8[%c1_123, %c0_124, %c0_125] : memref<2x1x32xf32, #tpu.memory_space<vmem>>, vector<1x1x32xf32>
    %287 = vector.shape_cast %286 : vector<1x1x32xf32> to vector<1x32xf32>
    %c1_126 = arith.constant 1 : index
    %c0_127 = arith.constant 0 : index
    %c0_128 = arith.constant 0 : index
    %288 = vector.load %arg9[%c1_126, %c0_127, %c0_128] : memref<2x1x32xf32, #tpu.memory_space<vmem>>, vector<1x1x32xf32>
    %289 = vector.shape_cast %288 : vector<1x1x32xf32> to vector<1x32xf32>
    %cst_129 = arith.constant dense<0.000000e+00> : vector<8xf32>
    %290 = vector.multi_reduction <add>, %285, %cst_129 [1] : vector<8x32xf32> to vector<8xf32>
    %291 = vector.shape_cast %290 : vector<8xf32> to vector<8x1xf32>
    %cst_130 = arith.constant 3.200000e+01 : f32
    %292 = vector.broadcast %cst_130 : f32 to vector<8x1xf32>
    %293 = arith.divf %291, %292 : vector<8x1xf32>
    %294 = vector.broadcast %293 : vector<8x1xf32> to vector<8x32xf32>
    %295 = arith.subf %285, %294 : vector<8x32xf32>
    %296 = arith.mulf %295, %295 : vector<8x32xf32>
    %cst_131 = arith.constant dense<0.000000e+00> : vector<8xf32>
    %297 = vector.multi_reduction <add>, %296, %cst_131 [1] : vector<8x32xf32> to vector<8xf32>
    %298 = vector.shape_cast %297 : vector<8xf32> to vector<8x1xf32>
    %cst_132 = arith.constant 3.200000e+01 : f32
    %299 = vector.broadcast %cst_132 : f32 to vector<8x1xf32>
    %300 = arith.divf %298, %299 : vector<8x1xf32>
    %cst_133 = arith.constant 9.99999996E-13 : f32
    %301 = vector.broadcast %cst_133 : f32 to vector<8x1xf32>
    %302 = arith.addf %300, %301 : vector<8x1xf32>
    %303 = math.rsqrt %302 : vector<8x1xf32>
    %304 = vector.broadcast %303 : vector<8x1xf32> to vector<8x32xf32>
    %305 = arith.mulf %295, %304 : vector<8x32xf32>
    %306 = vector.broadcast %287 : vector<1x32xf32> to vector<8x32xf32>
    %307 = arith.mulf %305, %306 : vector<8x32xf32>
    %308 = vector.broadcast %289 : vector<1x32xf32> to vector<8x32xf32>
    %309 = arith.addf %307, %308 : vector<8x32xf32>
    %c1_134 = arith.constant 1 : index
    %c0_135 = arith.constant 0 : index
    %c0_136 = arith.constant 0 : index
    %310 = vector.load %arg10[%c1_134, %c0_135, %c0_136] : memref<2x32x64xf32, #tpu.memory_space<vmem>>, vector<1x32x64xf32>
    %311 = vector.shape_cast %310 : vector<1x32x64xf32> to vector<32x64xf32>
    %cst_137 = arith.constant dense<0.000000e+00> : vector<8x64xf32>
    %312 = tpu.matmul %309, %311, %cst_137 {dimension_numbers = #tpu.dot_dimension_numbers<[1], [0], [0], [1], [0, 0, 1, 1], [], []>} : vector<8x32xf32>, vector<32x64xf32>, vector<8x64xf32> -> vector<8x64xf32>
    %c1_138 = arith.constant 1 : index
    %c0_139 = arith.constant 0 : index
    %c0_140 = arith.constant 0 : index
    %313 = vector.load %arg11[%c1_138, %c0_139, %c0_140] : memref<2x1x64xf32, #tpu.memory_space<vmem>>, vector<1x1x64xf32>
    %314 = vector.shape_cast %313 : vector<1x1x64xf32> to vector<1x64xf32>
    %315 = vector.broadcast %314 : vector<1x64xf32> to vector<8x64xf32>
    %316 = arith.addf %312, %315 : vector<8x64xf32>
    %cst_141 = arith.constant 5.000000e-01 : f32
    %317 = vector.broadcast %cst_141 : f32 to vector<8x64xf32>
    %318 = arith.mulf %317, %316 : vector<8x64xf32>
    %cst_142 = arith.constant 4.471500e-02 : f32
    %319 = vector.broadcast %cst_142 : f32 to vector<8x64xf32>
    %320 = arith.mulf %319, %316 : vector<8x64xf32>
    %321 = arith.mulf %320, %316 : vector<8x64xf32>
    %322 = arith.mulf %321, %316 : vector<8x64xf32>
    %323 = arith.addf %316, %322 : vector<8x64xf32>
    %cst_143 = arith.constant 0.797884583 : f32
    %324 = vector.broadcast %cst_143 : f32 to vector<8x64xf32>
    %325 = arith.mulf %324, %323 : vector<8x64xf32>
    %326 = math.tanh %325 : vector<8x64xf32>
    %cst_144 = arith.constant 1.000000e+00 : f32
    %327 = vector.broadcast %cst_144 : f32 to vector<8x64xf32>
    %328 = arith.addf %327, %326 : vector<8x64xf32>
    %329 = arith.mulf %318, %328 : vector<8x64xf32>
    %c1_145 = arith.constant 1 : index
    %c0_146 = arith.constant 0 : index
    %c0_147 = arith.constant 0 : index
    %330 = vector.load %arg12[%c1_145, %c0_146, %c0_147] : memref<2x64x32xf32, #tpu.memory_space<vmem>>, vector<1x64x32xf32>
    %331 = vector.shape_cast %330 : vector<1x64x32xf32> to vector<64x32xf32>
    %cst_148 = arith.constant dense<0.000000e+00> : vector<8x32xf32>
    %332 = tpu.matmul %329, %331, %cst_148 {dimension_numbers = #tpu.dot_dimension_numbers<[1], [0], [0], [1], [0, 0, 1, 1], [], []>} : vector<8x64xf32>, vector<64x32xf32>, vector<8x32xf32> -> vector<8x32xf32>
    %c1_149 = arith.constant 1 : index
    %c0_150 = arith.constant 0 : index
    %c0_151 = arith.constant 0 : index
    %333 = vector.load %arg13[%c1_149, %c0_150, %c0_151] : memref<2x1x32xf32, #tpu.memory_space<vmem>>, vector<1x1x32xf32>
    %334 = vector.shape_cast %333 : vector<1x1x32xf32> to vector<1x32xf32>
    %335 = vector.broadcast %334 : vector<1x32xf32> to vector<8x32xf32>
    %336 = arith.addf %332, %335 : vector<8x32xf32>
    %337 = arith.addf %336, %309 : vector<8x32xf32>
    %c1_152 = arith.constant 1 : index
    %c0_153 = arith.constant 0 : index
    %c0_154 = arith.constant 0 : index
    %338 = vector.load %arg14[%c1_152, %c0_153, %c0_154] : memref<2x1x32xf32, #tpu.memory_space<vmem>>, vector<1x1x32xf32>
    %339 = vector.shape_cast %338 : vector<1x1x32xf32> to vector<1x32xf32>
    %c1_155 = arith.constant 1 : index
    %c0_156 = arith.constant 0 : index
    %c0_157 = arith.constant 0 : index
    %340 = vector.load %arg15[%c1_155, %c0_156, %c0_157] : memref<2x1x32xf32, #tpu.memory_space<vmem>>, vector<1x1x32xf32>
    %341 = vector.shape_cast %340 : vector<1x1x32xf32> to vector<1x32xf32>
    %cst_158 = arith.constant dense<0.000000e+00> : vector<8xf32>
    %342 = vector.multi_reduction <add>, %337, %cst_158 [1] : vector<8x32xf32> to vector<8xf32>
    %343 = vector.shape_cast %342 : vector<8xf32> to vector<8x1xf32>
    %cst_159 = arith.constant 3.200000e+01 : f32
    %344 = vector.broadcast %cst_159 : f32 to vector<8x1xf32>
    %345 = arith.divf %343, %344 : vector<8x1xf32>
    %346 = vector.broadcast %345 : vector<8x1xf32> to vector<8x32xf32>
    %347 = arith.subf %337, %346 : vector<8x32xf32>
    %348 = arith.mulf %347, %347 : vector<8x32xf32>
    %cst_160 = arith.constant dense<0.000000e+00> : vector<8xf32>
    %349 = vector.multi_reduction <add>, %348, %cst_160 [1] : vector<8x32xf32> to vector<8xf32>
    %350 = vector.shape_cast %349 : vector<8xf32> to vector<8x1xf32>
    %cst_161 = arith.constant 3.200000e+01 : f32
    %351 = vector.broadcast %cst_161 : f32 to vector<8x1xf32>
    %352 = arith.divf %350, %351 : vector<8x1xf32>
    %cst_162 = arith.constant 9.99999996E-13 : f32
    %353 = vector.broadcast %cst_162 : f32 to vector<8x1xf32>
    %354 = arith.addf %352, %353 : vector<8x1xf32>
    %355 = math.rsqrt %354 : vector<8x1xf32>
    %356 = vector.broadcast %355 : vector<8x1xf32> to vector<8x32xf32>
    %357 = arith.mulf %347, %356 : vector<8x32xf32>
    %358 = vector.broadcast %339 : vector<1x32xf32> to vector<8x32xf32>
    %359 = arith.mulf %357, %358 : vector<8x32xf32>
    %360 = vector.broadcast %341 : vector<1x32xf32> to vector<8x32xf32>
    %361 = arith.addf %359, %360 : vector<8x32xf32>
    %c0_163 = arith.constant 0 : index
    %c0_164 = arith.constant 0 : index
    %362 = vector.load %arg16[%c0_163, %c0_164] : memref<32x128xf32, #tpu.memory_space<vmem>>, vector<32x128xf32>
    %cst_165 = arith.constant dense<0.000000e+00> : vector<8x128xf32>
    %363 = tpu.matmul %361, %362, %cst_165 {dimension_numbers = #tpu.dot_dimension_numbers<[1], [0], [0], [1], [0, 0, 1, 1], [], []>} : vector<8x32xf32>, vector<32x128xf32>, vector<8x128xf32> -> vector<8x128xf32>
    %c0_166 = arith.constant 0 : index
    %c0_167 = arith.constant 0 : index
    %364 = vector.load %arg17[%c0_166, %c0_167] : memref<1x128xf32, #tpu.memory_space<vmem>>, vector<1x128xf32>
    %365 = vector.broadcast %364 : vector<1x128xf32> to vector<8x128xf32>
    %366 = arith.addf %363, %365 : vector<8x128xf32>
    %c0_168 = arith.constant 0 : index
    %c0_169 = arith.constant 0 : index
    %c0_170 = arith.constant 0 : index
    %367 = vector.load %arg18[%c0_168, %c0_169, %c0_170] : memref<1x8x128xf32, #tpu.memory_space<vmem>>, vector<1x8x128xf32>
    %368 = vector.shape_cast %367 : vector<1x8x128xf32> to vector<8x128xf32>
    %369 = vector.shape_cast %366 : vector<8x128xf32> to vector<1x8x128xf32>
    tpu.vector_store %arg18[%c0_168, %c0_169, %c0_170], %369 {strides = array<i32>} : memref<1x8x128xf32, #tpu.memory_space<vmem>>, vector<1x8x128xf32>,
    return
  }
  func.func @transform_0(%arg0: i32) -> (i32, i32, i32) {
    %c0_i32 = arith.constant 0 : i32
    %c0_i32_0 = arith.constant 0 : i32
    %c0_i32_1 = arith.constant 0 : i32
    return %arg0, %c0_i32, %c0_i32_0 : i32, i32, i32
  }
  func.func @transform_1(%arg0: i32) -> (i32, i32) {
    %c0_i32 = arith.constant 0 : i32
    %c0_i32_0 = arith.constant 0 : i32
    %c0_i32_1 = arith.constant 0 : i32
    return %c0_i32, %c0_i32_0 : i32, i32
  }
  func.func @transform_2(%arg0: i32) -> (i32, i32) {
    %c0_i32 = arith.constant 0 : i32
    %c0_i32_0 = arith.constant 0 : i32
    %c0_i32_1 = arith.constant 0 : i32
    return %c0_i32, %c0_i32_0 : i32, i32
  }
  func.func @transform_3(%arg0: i32) -> (i32, i32, i32) {
    %c0_i32 = arith.constant 0 : i32
    %c0_i32_0 = arith.constant 0 : i32
    %c0_i32_1 = arith.constant 0 : i32
    %c0_i32_2 = arith.constant 0 : i32
    return %c0_i32, %c0_i32_0, %c0_i32_1 : i32, i32, i32
  }
  func.func @transform_4(%arg0: i32) -> (i32, i32, i32) {
    %c0_i32 = arith.constant 0 : i32
    %c0_i32_0 = arith.constant 0 : i32
    %c0_i32_1 = arith.constant 0 : i32
    %c0_i32_2 = arith.constant 0 : i32
    return %c0_i32, %c0_i32_0, %c0_i32_1 : i32, i32, i32
  }
  func.func @transform_5(%arg0: i32) -> (i32, i32, i32) {
    %c0_i32 = arith.constant 0 : i32
    %c0_i32_0 = arith.constant 0 : i32
    %c0_i32_1 = arith.constant 0 : i32
    %c0_i32_2 = arith.constant 0 : i32
    return %c0_i32, %c0_i32_0, %c0_i32_1 : i32, i32, i32
  }
  func.func @transform_6(%arg0: i32) -> (i32, i32, i32) {
    %c0_i32 = arith.constant 0 : i32
    %c0_i32_0 = arith.constant 0 : i32
    %c0_i32_1 = arith.constant 0 : i32
    %c0_i32_2 = arith.constant 0 : i32
    return %c0_i32, %c0_i32_0, %c0_i32_1 : i32, i32, i32
  }
  func.func @transform_7(%arg0: i32) -> (i32, i32, i32) {
    %c0_i32 = arith.constant 0 : i32
    %c0_i32_0 = arith.constant 0 : i32
    %c0_i32_1 = arith.constant 0 : i32
    %c0_i32_2 = arith.constant 0 : i32
    return %c0_i32, %c0_i32_0, %c0_i32_1 : i32, i32, i32
  }
  func.func @transform_8(%arg0: i32) -> (i32, i32, i32) {
    %c0_i32 = arith.constant 0 : i32
    %c0_i32_0 = arith.constant 0 : i32
    %c0_i32_1 = arith.constant 0 : i32
    %c0_i32_2 = arith.constant 0 : i32
    return %c0_i32, %c0_i32_0, %c0_i32_1 : i32, i32, i32
  }
  func.func @transform_9(%arg0: i32) -> (i32, i32, i32) {
    %c0_i32 = arith.constant 0 : i32
    %c0_i32_0 = arith.constant 0 : i32
    %c0_i32_1 = arith.constant 0 : i32
    %c0_i32_2 = arith.constant 0 : i32
    return %c0_i32, %c0_i32_0, %c0_i32_1 : i32, i32, i32
  }
  func.func @transform_10(%arg0: i32) -> (i32, i32, i32) {
    %c0_i32 = arith.constant 0 : i32
    %c0_i32_0 = arith.constant 0 : i32
    %c0_i32_1 = arith.constant 0 : i32
    %c0_i32_2 = arith.constant 0 : i32
    return %c0_i32, %c0_i32_0, %c0_i32_1 : i32, i32, i32
  }
  func.func @transform_11(%arg0: i32) -> (i32, i32, i32) {
    %c0_i32 = arith.constant 0 : i32
    %c0_i32_0 = arith.constant 0 : i32
    %c0_i32_1 = arith.constant 0 : i32
    %c0_i32_2 = arith.constant 0 : i32
    return %c0_i32, %c0_i32_0, %c0_i32_1 : i32, i32, i32
  }
  func.func @transform_12(%arg0: i32) -> (i32, i32, i32) {
    %c0_i32 = arith.constant 0 : i32
    %c0_i32_0 = arith.constant 0 : i32
    %c0_i32_1 = arith.constant 0 : i32
    %c0_i32_2 = arith.constant 0 : i32
    return %c0_i32, %c0_i32_0, %c0_i32_1 : i32, i32, i32
  }
  func.func @transform_13(%arg0: i32) -> (i32, i32, i32) {
    %c0_i32 = arith.constant 0 : i32
    %c0_i32_0 = arith.constant 0 : i32
    %c0_i32_1 = arith.constant 0 : i32
    %c0_i32_2 = arith.constant 0 : i32
    return %c0_i32, %c0_i32_0, %c0_i32_1 : i32, i32, i32
  }
  func.func @transform_14(%arg0: i32) -> (i32, i32, i32) {
    %c0_i32 = arith.constant 0 : i32
    %c0_i32_0 = arith.constant 0 : i32
    %c0_i32_1 = arith.constant 0 : i32
    %c0_i32_2 = arith.constant 0 : i32
    return %c0_i32, %c0_i32_0, %c0_i32_1 : i32, i32, i32
  }
  func.func @transform_15(%arg0: i32) -> (i32, i32) {
    %c0_i32 = arith.constant 0 : i32
    %c0_i32_0 = arith.constant 0 : i32
    %c0_i32_1 = arith.constant 0 : i32
    return %c0_i32, %c0_i32_0 : i32, i32
  }
  func.func @transform_16(%arg0: i32) -> (i32, i32) {
    %c0_i32 = arith.constant 0 : i32
    %c0_i32_0 = arith.constant 0 : i32
    %c0_i32_1 = arith.constant 0 : i32
    return %c0_i32, %c0_i32_0 : i32, i32
  }
  func.func @transform_17(%arg0: i32) -> (i32, i32, i32) {
    %c0_i32 = arith.constant 0 : i32
    %c0_i32_0 = arith.constant 0 : i32
    %c0_i32_1 = arith.constant 0 : i32
    return %arg0, %c0_i32, %c0_i32_0 : i32, i32, i32
  }
}

</mosaic_0001>

<llo_original>
// kernel: torch_model_forward.1
$region0: #{torch_model_forward.1}
  #allocation0 [shape = 'u32[]', space=smem, size = 0x4, offset = 0x4, fixed_abs, tag = 'smem constant byte address 0x4 - core index']
  #allocation1 [shape = 'u32[72,128]{1,0:T(1,128)}', space=vmem, size = 0x9000, scoped, tag = 'internal scratch']
  %s0 = inlined_call_operand.vmem [shape: f32[2,8,32], index: 0, kind: input, shape index: {}]
  %s1 = inlined_call_operand.vmem [shape: f32[1,32], index: 1, kind: input, shape index: {}]
  %s2 = inlined_call_operand.vmem [shape: f32[1,32], index: 2, kind: input, shape index: {}]
  %s3 = inlined_call_operand.vmem [shape: f32[2,32,96], index: 3, kind: input, shape index: {}]
  %s4 = inlined_call_operand.vmem [shape: f32[2,1,96], index: 4, kind: input, shape index: {}]
  %s5 = inlined_call_operand.vmem [shape: f32[2,32,32], index: 5, kind: input, shape index: {}]
  %s6 = inlined_call_operand.vmem [shape: f32[2,1,32], index: 6, kind: input, shape index: {}]
  %s7 = inlined_call_operand.vmem [shape: f32[2,1,32], index: 7, kind: input, shape index: {}]
  %s8 = inlined_call_operand.vmem [shape: f32[2,1,32], index: 8, kind: input, shape index: {}]
  %s9 = inlined_call_operand.vmem [shape: f32[2,32,64], index: 9, kind: input, shape index: {}]
  %s10 = inlined_call_operand.vmem [shape: f32[2,1,64], index: 10, kind: input, shape index: {}]
  %s11 = inlined_call_operand.vmem [shape: f32[2,64,32], index: 11, kind: input, shape index: {}]
  %s12 = inlined_call_operand.vmem [shape: f32[2,1,32], index: 12, kind: input, shape index: {}]
  %s13 = inlined_call_operand.vmem [shape: f32[2,1,32], index: 13, kind: input, shape index: {}]
  %s14 = inlined_call_operand.vmem [shape: f32[2,1,32], index: 14, kind: input, shape index: {}]
  %s15 = inlined_call_operand.vmem [shape: f32[32,128], index: 15, kind: input, shape index: {}]
  %s16 = inlined_call_operand.vmem [shape: f32[1,128], index: 16, kind: input, shape index: {}]
  %s17 = inlined_call_operand.hbm [shape: f32[2,8,128], index: 17, kind: output, shape index: {}]
  %s18 = sld [smem:[#allocation0]]
  $region101: #{torch_model_forward.1} parent=0
    _
  %s20 = ssub.s32 1, %s18
  %s21 = scalar_select 0, %s20, %s18
  $region1: #{torch_model_forward.1} parent=0
    #allocation2 [shape = 'u8[8192]{0}', space=vmem, size = 0x2000, scoped, tag = 'output window, operand 0']
    #allocation3 [shape = 's32[2]{0}', space=sflag, size = 0x8, scoped, tag = 'scoped memory for torch_model_forward.1']
    %22 = vsyncpa [#allocation3], 0
    %s23 = scalar_lea.sflag [#allocation3], 1
    %24 = vsyncpa %s23, 0
    loop: start=0, step=1, limit=4
    $region2: #{torch_model_forward.1} parent=1 // loop_pre_header
      _
    $region3: #{torch_model_forward.1} parent=1 // loop_header
      %s26 = sphi 0, %s30
      %p27 = scmp.ge.s32.totalorder %s26, 4
      %s36 = sphi 0, %s38
      %s39 = sphi 0, %s36
      %s40 = sphi 0, %s39
      %s56 = sphi 0, %s40
      %s60 = sphi 0, %s60
      %s62 = sphi 0, %s60
      %s63 = sphi 0, %s62
      %s77 = sphi 0, %s63
      %s81 = sphi 0, %s81
      %s83 = sphi 0, %s81
      %s84 = sphi 0, %s83
      %s98 = sphi 0, %s84
      %s102 = sphi 0, %s102
      %s104 = sphi 0, %s102
      %s105 = sphi 0, %s104
      %s119 = sphi 0, %s105
      %s123 = sphi 0, %s123
      %s125 = sphi 0, %s123
      %s126 = sphi 0, %s125
      %s140 = sphi 0, %s126
      %s144 = sphi 0, %s144
      %s146 = sphi 0, %s144
      %s147 = sphi 0, %s146
      %s161 = sphi 0, %s147
      %s165 = sphi 0, %s165
      %s167 = sphi 0, %s165
      %s168 = sphi 0, %s167
      %s182 = sphi 0, %s168
      %s186 = sphi 0, %s186
      %s188 = sphi 0, %s186
      %s189 = sphi 0, %s188
      %s203 = sphi 0, %s189
      %s207 = sphi 0, %s207
      %s209 = sphi 0, %s207
      %s210 = sphi 0, %s209
      %s224 = sphi 0, %s210
      %s228 = sphi 0, %s228
      %s230 = sphi 0, %s228
      %s231 = sphi 0, %s230
      %s245 = sphi 0, %s231
      %s249 = sphi 0, %s249
      %s251 = sphi 0, %s249
      %s252 = sphi 0, %s251
      %s266 = sphi 0, %s252
      %s270 = sphi 0, %s270
      %s272 = sphi 0, %s270
      %s273 = sphi 0, %s272
      %s287 = sphi 0, %s273
      %s291 = sphi 0, %s291
      %s293 = sphi 0, %s291
      %s294 = sphi 0, %s293
      %s308 = sphi 0, %s294
      %s312 = sphi 0, %s312
      %s314 = sphi 0, %s312
      %s315 = sphi 0, %s314
      %s329 = sphi 0, %s315
      %s333 = sphi 0, %s333
      %s335 = sphi 0, %s333
      %s336 = sphi 0, %s335
      %s350 = sphi 0, %s336
      %s354 = sphi 0, %s354
      %s356 = sphi 0, %s354
      %s357 = sphi 0, %s356
      %s371 = sphi 0, %s357
      %s375 = sphi 0, %s375
      %s377 = sphi 0, %s375
      %s378 = sphi 0, %s377
      %s392 = sphi 0, %s378
      %s398 = sphi 0, %s400
      %s401 = sphi 0, %s398
      %s402 = sphi 0, %s401
      %s418 = sphi 0, %s402
    $region4: #{torch_model_forward.1} parent=1 // loop_header_branch
      %29 = sbr.rel (%p27) target = $region8
    $region5: #{torch_model_forward.1} parent=1 // loop_body
      %s31 = ssub.s32 %s26, 1
      %s32 = ssub.s32 %s26, 2
      %s33 = sadd.s32 %s26, 1
      %s34 = ssub.s32 %s26, %s33
      %p35 = scmp.eq.s32.totalorder %s34, 0
      %s37 = sadd.s32 %s36, 1
      %s38 = scalar_select %p35, %s36, %s37
      %p41 = pneg %p35
      %p42 = scmp.eq.s32.totalorder %s26, 1
      %p43 = por %p41, %p42
      %p44 = scmp.ne.s32.totalorder %s36, %s39
      %p45 = scmp.eq.s32.totalorder %s26, 0
      %p46 = por %p44, %p45
      %p47 = scmp.ne.s32.totalorder %s36, %s39
      %p48 = scmp.eq.s32.totalorder %s31, 1
      %p49 = por %p47, %p48
      %p50 = scmp.ne.s32.totalorder %s39, %s40
      %p51 = scmp.eq.s32.totalorder %s31, 0
      %p52 = por %p50, %p51
      %p53 = scmp.ne.s32.totalorder %s39, %s40
      %p54 = scmp.eq.s32.totalorder %s32, 1
      %p55 = por %p53, %p54
      %p57 = scmp.ne.s32.totalorder %s40, %s56
      %p58 = scmp.eq.s32.totalorder %s32, 0
      %p59 = por %p57, %p58
      %s61 = sadd.s32 %s60, 1
      %p64 = scmp.eq.s32.totalorder %s26, 1
      %p65 = scmp.ne.s32.totalorder %s60, %s62
      %p66 = scmp.eq.s32.totalorder %s26, 0
      %p67 = por %p65, %p66
      %p68 = scmp.ne.s32.totalorder %s60, %s62
      %p69 = scmp.eq.s32.totalorder %s31, 1
      %p70 = por %p68, %p69
      %p71 = scmp.ne.s32.totalorder %s62, %s63
      %p72 = scmp.eq.s32.totalorder %s31, 0
      %p73 = por %p71, %p72
      %p74 = scmp.ne.s32.totalorder %s62, %s63
      %p75 = scmp.eq.s32.totalorder %s32, 1
      %p76 = por %p74, %p75
      %p78 = scmp.ne.s32.totalorder %s63, %s77
      %p79 = scmp.eq.s32.totalorder %s32, 0
      %p80 = por %p78, %p79
      %s82 = sadd.s32 %s81, 1
      %p85 = scmp.eq.s32.totalorder %s26, 1
      %p86 = scmp.ne.s32.totalorder %s81, %s83
      %p87 = scmp.eq.s32.totalorder %s26, 0
      %p88 = por %p86, %p87
      %p89 = scmp.ne.s32.totalorder %s81, %s83
      %p90 = scmp.eq.s32.totalorder %s31, 1
      %p91 = por %p89, %p90
      %p92 = scmp.ne.s32.totalorder %s83, %s84
      %p93 = scmp.eq.s32.totalorder %s31, 0
      %p94 = por %p92, %p93
      %p95 = scmp.ne.s32.totalorder %s83, %s84
      %p96 = scmp.eq.s32.totalorder %s32, 1
      %p97 = por %p95, %p96
      %p99 = scmp.ne.s32.totalorder %s84, %s98
      %p100 = scmp.eq.s32.totalorder %s32, 0
      %p101 = por %p99, %p100
      %s103 = sadd.s32 %s102, 1
      %p106 = scmp.eq.s32.totalorder %s26, 1
      %p107 = scmp.ne.s32.totalorder %s102, %s104
      %p108 = scmp.eq.s32.totalorder %s26, 0
      %p109 = por %p107, %p108
      %p110 = scmp.ne.s32.totalorder %s102, %s104
      %p111 = scmp.eq.s32.totalorder %s31, 1
      %p112 = por %p110, %p111
      %p113 = scmp.ne.s32.totalorder %s104, %s105
      %p114 = scmp.eq.s32.totalorder %s31, 0
      %p115 = por %p113, %p114
      %p116 = scmp.ne.s32.totalorder %s104, %s105
      %p117 = scmp.eq.s32.totalorder %s32, 1
      %p118 = por %p116, %p117
      %p120 = scmp.ne.s32.totalorder %s105, %s119
      %p121 = scmp.eq.s32.totalorder %s32, 0
      %p122 = por %p120, %p121
      %s124 = sadd.s32 %s123, 1
      %p127 = scmp.eq.s32.totalorder %s26, 1
      %p128 = scmp.ne.s32.totalorder %s123, %s125
      %p129 = scmp.eq.s32.totalorder %s26, 0
      %p130 = por %p128, %p129
      %p131 = scmp.ne.s32.totalorder %s123, %s125
      %p132 = scmp.eq.s32.totalorder %s31, 1
      %p133 = por %p131, %p132
      %p134 = scmp.ne.s32.totalorder %s125, %s126
      %p135 = scmp.eq.s32.totalorder %s31, 0
      %p136 = por %p134, %p135
      %p137 = scmp.ne.s32.totalorder %s125, %s126
      %p138 = scmp.eq.s32.totalorder %s32, 1
      %p139 = por %p137, %p138
      %p141 = scmp.ne.s32.totalorder %s126, %s140
      %p142 = scmp.eq.s32.totalorder %s32, 0
      %p143 = por %p141, %p142
      %s145 = sadd.s32 %s144, 1
      %p148 = scmp.eq.s32.totalorder %s26, 1
      %p149 = scmp.ne.s32.totalorder %s144, %s146
      %p150 = scmp.eq.s32.totalorder %s26, 0
      %p151 = por %p149, %p150
      %p152 = scmp.ne.s32.totalorder %s144, %s146
      %p153 = scmp.eq.s32.totalorder %s31, 1
      %p154 = por %p152, %p153
      %p155 = scmp.ne.s32.totalorder %s146, %s147
      %p156 = scmp.eq.s32.totalorder %s31, 0
      %p157 = por %p155, %p156
      %p158 = scmp.ne.s32.totalorder %s146, %s147
      %p159 = scmp.eq.s32.totalorder %s32, 1
      %p160 = por %p158, %p159
      %p162 = scmp.ne.s32.totalorder %s147, %s161
      %p163 = scmp.eq.s32.totalorder %s32, 0
      %p164 = por %p162, %p163
      %s166 = sadd.s32 %s165, 1
      %p169 = scmp.eq.s32.totalorder %s26, 1
      %p170 = scmp.ne.s32.totalorder %s165, %s167
      %p171 = scmp.eq.s32.totalorder %s26, 0
      %p172 = por %p170, %p171
      %p173 = scmp.ne.s32.totalorder %s165, %s167
      %p174 = scmp.eq.s32.totalorder %s31, 1
      %p175 = por %p173, %p174
      %p176 = scmp.ne.s32.totalorder %s167, %s168
      %p177 = scmp.eq.s32.totalorder %s31, 0
      %p178 = por %p176, %p177
      %p179 = scmp.ne.s32.totalorder %s167, %s168
      %p180 = scmp.eq.s32.totalorder %s32, 1
      %p181 = por %p179, %p180
      %p183 = scmp.ne.s32.totalorder %s168, %s182
      %p184 = scmp.eq.s32.totalorder %s32, 0
      %p185 = por %p183, %p184
      %s187 = sadd.s32 %s186, 1
      %p190 = scmp.eq.s32.totalorder %s26, 1
      %p191 = scmp.ne.s32.totalorder %s186, %s188
      %p192 = scmp.eq.s32.totalorder %s26, 0
      %p193 = por %p191, %p192
      %p194 = scmp.ne.s32.totalorder %s186, %s188
      %p195 = scmp.eq.s32.totalorder %s31, 1
      %p196 = por %p194, %p195
      %p197 = scmp.ne.s32.totalorder %s188, %s189
      %p198 = scmp.eq.s32.totalorder %s31, 0
      %p199 = por %p197, %p198
      %p200 = scmp.ne.s32.totalorder %s188, %s189
      %p201 = scmp.eq.s32.totalorder %s32, 1
      %p202 = por %p200, %p201
      %p204 = scmp.ne.s32.totalorder %s189, %s203
      %p205 = scmp.eq.s32.totalorder %s32, 0
      %p206 = por %p204, %p205
      %s208 = sadd.s32 %s207, 1
      %p211 = scmp.eq.s32.totalorder %s26, 1
      %p212 = scmp.ne.s32.totalorder %s207, %s209
      %p213 = scmp.eq.s32.totalorder %s26, 0
      %p214 = por %p212, %p213
      %p215 = scmp.ne.s32.totalorder %s207, %s209
      %p216 = scmp.eq.s32.totalorder %s31, 1
      %p217 = por %p215, %p216
      %p218 = scmp.ne.s32.totalorder %s209, %s210
      %p219 = scmp.eq.s32.totalorder %s31, 0
      %p220 = por %p218, %p219
      %p221 = scmp.ne.s32.totalorder %s209, %s210
      %p222 = scmp.eq.s32.totalorder %s32, 1
      %p223 = por %p221, %p222
      %p225 = scmp.ne.s32.totalorder %s210, %s224
      %p226 = scmp.eq.s32.totalorder %s32, 0
      %p227 = por %p225, %p226
      %s229 = sadd.s32 %s228, 1
      %p232 = scmp.eq.s32.totalorder %s26, 1
      %p233 = scmp.ne.s32.totalorder %s228, %s230
      %p234 = scmp.eq.s32.totalorder %s26, 0
      %p235 = por %p233, %p234
      %p236 = scmp.ne.s32.totalorder %s228, %s230
      %p237 = scmp.eq.s32.totalorder %s31, 1
      %p238 = por %p236, %p237
      %p239 = scmp.ne.s32.totalorder %s230, %s231
      %p240 = scmp.eq.s32.totalorder %s31, 0
      %p241 = por %p239, %p240
      %p242 = scmp.ne.s32.totalorder %s230, %s231
      %p243 = scmp.eq.s32.totalorder %s32, 1
      %p244 = por %p242, %p243
      %p246 = scmp.ne.s32.totalorder %s231, %s245
      %p247 = scmp.eq.s32.totalorder %s32, 0
      %p248 = por %p246, %p247
      %s250 = sadd.s32 %s249, 1
      %p253 = scmp.eq.s32.totalorder %s26, 1
      %p254 = scmp.ne.s32.totalorder %s249, %s251
      %p255 = scmp.eq.s32.totalorder %s26, 0
      %p256 = por %p254, %p255
      %p257 = scmp.ne.s32.totalorder %s249, %s251
      %p258 = scmp.eq.s32.totalorder %s31, 1
      %p259 = por %p257, %p258
      %p260 = scmp.ne.s32.totalorder %s251, %s252
      %p261 = scmp.eq.s32.totalorder %s31, 0
      %p262 = por %p260, %p261
      %p263 = scmp.ne.s32.totalorder %s251, %s252
      %p264 = scmp.eq.s32.totalorder %s32, 1
      %p265 = por %p263, %p264
      %p267 = scmp.ne.s32.totalorder %s252, %s266
      %p268 = scmp.eq.s32.totalorder %s32, 0
      %p269 = por %p267, %p268
      %s271 = sadd.s32 %s270, 1
      %p274 = scmp.eq.s32.totalorder %s26, 1
      %p275 = scmp.ne.s32.totalorder %s270, %s272
      %p276 = scmp.eq.s32.totalorder %s26, 0
      %p277 = por %p275, %p276
      %p278 = scmp.ne.s32.totalorder %s270, %s272
      %p279 = scmp.eq.s32.totalorder %s31, 1
      %p280 = por %p278, %p279
      %p281 = scmp.ne.s32.totalorder %s272, %s273
      %p282 = scmp.eq.s32.totalorder %s31, 0
      %p283 = por %p281, %p282
      %p284 = scmp.ne.s32.totalorder %s272, %s273
      %p285 = scmp.eq.s32.totalorder %s32, 1
      %p286 = por %p284, %p285
      %p288 = scmp.ne.s32.totalorder %s273, %s287
      %p289 = scmp.eq.s32.totalorder %s32, 0
      %p290 = por %p288, %p289
      %s292 = sadd.s32 %s291, 1
      %p295 = scmp.eq.s32.totalorder %s26, 1
      %p296 = scmp.ne.s32.totalorder %s291, %s293
      %p297 = scmp.eq.s32.totalorder %s26, 0
      %p298 = por %p296, %p297
      %p299 = scmp.ne.s32.totalorder %s291, %s293
      %p300 = scmp.eq.s32.totalorder %s31, 1
      %p301 = por %p299, %p300
      %p302 = scmp.ne.s32.totalorder %s293, %s294
      %p303 = scmp.eq.s32.totalorder %s31, 0
      %p304 = por %p302, %p303
      %p305 = scmp.ne.s32.totalorder %s293, %s294
      %p306 = scmp.eq.s32.totalorder %s32, 1
      %p307 = por %p305, %p306
      %p309 = scmp.ne.s32.totalorder %s294, %s308
      %p310 = scmp.eq.s32.totalorder %s32, 0
      %p311 = por %p309, %p310
      %s313 = sadd.s32 %s312, 1
      %p316 = scmp.eq.s32.totalorder %s26, 1
      %p317 = scmp.ne.s32.totalorder %s312, %s314
      %p318 = scmp.eq.s32.totalorder %s26, 0
      %p319 = por %p317, %p318
      %p320 = scmp.ne.s32.totalorder %s312, %s314
      %p321 = scmp.eq.s32.totalorder %s31, 1
      %p322 = por %p320, %p321
      %p323 = scmp.ne.s32.totalorder %s314, %s315
      %p324 = scmp.eq.s32.totalorder %s31, 0
      %p325 = por %p323, %p324
      %p326 = scmp.ne.s32.totalorder %s314, %s315
      %p327 = scmp.eq.s32.totalorder %s32, 1
      %p328 = por %p326, %p327
      %p330 = scmp.ne.s32.totalorder %s315, %s329
      %p331 = scmp.eq.s32.totalorder %s32, 0
      %p332 = por %p330, %p331
      %s334 = sadd.s32 %s333, 1
      %p337 = scmp.eq.s32.totalorder %s26, 1
      %p338 = scmp.ne.s32.totalorder %s333, %s335
      %p339 = scmp.eq.s32.totalorder %s26, 0
      %p340 = por %p338, %p339
      %p341 = scmp.ne.s32.totalorder %s333, %s335
      %p342 = scmp.eq.s32.totalorder %s31, 1
      %p343 = por %p341, %p342
      %p344 = scmp.ne.s32.totalorder %s335, %s336
      %p345 = scmp.eq.s32.totalorder %s31, 0
      %p346 = por %p344, %p345
      %p347 = scmp.ne.s32.totalorder %s335, %s336
      %p348 = scmp.eq.s32.totalorder %s32, 1
      %p349 = por %p347, %p348
      %p351 = scmp.ne.s32.totalorder %s336, %s350
      %p352 = scmp.eq.s32.totalorder %s32, 0
      %p353 = por %p351, %p352
      %s355 = sadd.s32 %s354, 1
      %p358 = scmp.eq.s32.totalorder %s26, 1
      %p359 = scmp.ne.s32.totalorder %s354, %s356
      %p360 = scmp.eq.s32.totalorder %s26, 0
      %p361 = por %p359, %p360
      %p362 = scmp.ne.s32.totalorder %s354, %s356
      %p363 = scmp.eq.s32.totalorder %s31, 1
      %p364 = por %p362, %p363
      %p365 = scmp.ne.s32.totalorder %s356, %s357
      %p366 = scmp.eq.s32.totalorder %s31, 0
      %p367 = por %p365, %p366
      %p368 = scmp.ne.s32.totalorder %s356, %s357
      %p369 = scmp.eq.s32.totalorder %s32, 1
      %p370 = por %p368, %p369
      %p372 = scmp.ne.s32.totalorder %s357, %s371
      %p373 = scmp.eq.s32.totalorder %s32, 0
      %p374 = por %p372, %p373
      %s376 = sadd.s32 %s375, 1
      %p379 = scmp.eq.s32.totalorder %s26, 1
      %p380 = scmp.ne.s32.totalorder %s375, %s377
      %p381 = scmp.eq.s32.totalorder %s26, 0
      %p382 = por %p380, %p381
      %p383 = scmp.ne.s32.totalorder %s375, %s377
      %p384 = scmp.eq.s32.totalorder %s31, 1
      %p385 = por %p383, %p384
      %p386 = scmp.ne.s32.totalorder %s377, %s378
      %p387 = scmp.eq.s32.totalorder %s31, 0
      %p388 = por %p386, %p387
      %p389 = scmp.ne.s32.totalorder %s377, %s378
      %p390 = scmp.eq.s32.totalorder %s32, 1
      %p391 = por %p389, %p390
      %p393 = scmp.ne.s32.totalorder %s378, %s392
      %p394 = scmp.eq.s32.totalorder %s32, 0
      %p395 = por %p393, %p394
      %s396 = ssub.s32 %s26, %s33
      %p397 = scmp.eq.s32.totalorder %s396, 0
      %s399 = sadd.s32 %s398, 1
      %s400 = scalar_select %p397, %s398, %s399
      %p403 = pneg %p397
      %p404 = scmp.eq.s32.totalorder %s26, 1
      %p405 = por %p403, %p404
      %p406 = scmp.ne.s32.totalorder %s398, %s401
      %p407 = scmp.eq.s32.totalorder %s26, 0
      %p408 = por %p406, %p407
      %p409 = scmp.ne.s32.totalorder %s398, %s401
      %p410 = scmp.eq.s32.totalorder %s31, 1
      %p411 = por %p409, %p410
      %p412 = scmp.ne.s32.totalorder %s401, %s402
      %p413 = scmp.eq.s32.totalorder %s31, 0
      %p414 = por %p412, %p413
      %p415 = scmp.ne.s32.totalorder %s401, %s402
      %p416 = scmp.eq.s32.totalorder %s32, 1
      %p417 = por %p415, %p416
      %p419 = scmp.ne.s32.totalorder %s402, %s418
      %p420 = scmp.eq.s32.totalorder %s32, 0
      %p421 = por %p419, %p420
      %p422 = scmp.le.s32.totalorder 1, %s26
      %p423 = scmp.lt.s32.totalorder %s26, 3
      %p424 = pnand %p422, %p423
      %p425 = pneg %p424
      // Predicated region
      $region9: #{torch_model_forward.1} parent=5 // pred_check
        _
      $region10: #{torch_model_forward.1} parent=5 // pred_check_branch
        %427 = sbr.rel (%p424) target = $region12
      $region11: #{torch_model_forward.1} parent=5 // pred_region
        %s428 = ssub.s32 %s26, 1
        // Predicated region
        $region13: #{torch_model_forward.1} parent=11 // pred_check
          %p429 = pneg %p73
        $region14: #{torch_model_forward.1} parent=11 // pred_check_branch
          %431 = sbr.rel (%p429) target = $region16
        $region15: #{torch_model_forward.1} parent=11 // pred_region
          _
        $region16: #{torch_model_forward.1} parent=11 // pred_fallthru
          _
        // Predicated region
        $region17: #{torch_model_forward.1} parent=11 // pred_check
          %p432 = pneg %p94
        $region18: #{torch_model_forward.1} parent=11 // pred_check_branch
          %434 = sbr.rel (%p432) target = $region20
        $region19: #{torch_model_forward.1} parent=11 // pred_region
          _
        $region20: #{torch_model_forward.1} parent=11 // pred_fallthru
          _
        // Predicated region
        $region21: #{torch_model_forward.1} parent=11 // pred_check
          %p435 = pneg %p115
        $region22: #{torch_model_forward.1} parent=11 // pred_check_branch
          %437 = sbr.rel (%p435) target = $region24
        $region23: #{torch_model_forward.1} parent=11 // pred_region
          _
        $region24: #{torch_model_forward.1} parent=11 // pred_fallthru
          _
        // Predicated region
        $region25: #{torch_model_forward.1} parent=11 // pred_check
          %p438 = pneg %p136
        $region26: #{torch_model_forward.1} parent=11 // pred_check_branch
          %440 = sbr.rel (%p438) target = $region28
        $region27: #{torch_model_forward.1} parent=11 // pred_region
          _
        $region28: #{torch_model_forward.1} parent=11 // pred_fallthru
          _
        // Predicated region
        $region29: #{torch_model_forward.1} parent=11 // pred_check
          %p441 = pneg %p157
        $region30: #{torch_model_forward.1} parent=11 // pred_check_branch
          %443 = sbr.rel (%p441) target = $region32
        $region31: #{torch_model_forward.1} parent=11 // pred_region
          _
        $region32: #{torch_model_forward.1} parent=11 // pred_fallthru
          _
        // Predicated region
        $region33: #{torch_model_forward.1} parent=11 // pred_check
          %p444 = pneg %p178
        $region34: #{torch_model_forward.1} parent=11 // pred_check_branch
          %446 = sbr.rel (%p444) target = $region36
        $region35: #{torch_model_forward.1} parent=11 // pred_region
          _
        $region36: #{torch_model_forward.1} parent=11 // pred_fallthru
          _
        // Predicated region
        $region37: #{torch_model_forward.1} parent=11 // pred_check
          %p447 = pneg %p199
        $region38: #{torch_model_forward.1} parent=11 // pred_check_branch
          %449 = sbr.rel (%p447) target = $region40
        $region39: #{torch_model_forward.1} parent=11 // pred_region
          _
        $region40: #{torch_model_forward.1} parent=11 // pred_fallthru
          _
        // Predicated region
        $region41: #{torch_model_forward.1} parent=11 // pred_check
          %p450 = pneg %p220
        $region42: #{torch_model_forward.1} parent=11 // pred_check_branch
          %452 = sbr.rel (%p450) target = $region44
        $region43: #{torch_model_forward.1} parent=11 // pred_region
          _
        $region44: #{torch_model_forward.1} parent=11 // pred_fallthru
          _
        // Predicated region
        $region45: #{torch_model_forward.1} parent=11 // pred_check
          %p453 = pneg %p241
        $region46: #{torch_model_forward.1} parent=11 // pred_check_branch
          %455 = sbr.rel (%p453) target = $region48
        $region47: #{torch_model_forward.1} parent=11 // pred_region
          _
        $region48: #{torch_model_forward.1} parent=11 // pred_fallthru
          _
        // Predicated region
        $region49: #{torch_model_forward.1} parent=11 // pred_check
          %p456 = pneg %p262
        $region50: #{torch_model_forward.1} parent=11 // pred_check_branch
          %458 = sbr.rel (%p456) target = $region52
        $region51: #{torch_model_forward.1} parent=11 // pred_region
          _
        $region52: #{torch_model_forward.1} parent=11 // pred_fallthru
          _
        // Predicated region
        $region53: #{torch_model_forward.1} parent=11 // pred_check
          %p459 = pneg %p283
        $region54: #{torch_model_forward.1} parent=11 // pred_check_branch
          %461 = sbr.rel (%p459) target = $region56
        $region55: #{torch_model_forward.1} parent=11 // pred_region
          _
        $region56: #{torch_model_forward.1} parent=11 // pred_fallthru
          _
        // Predicated region
        $region57: #{torch_model_forward.1} parent=11 // pred_check
          %p462 = pneg %p304
        $region58: #{torch_model_forward.1} parent=11 // pred_check_branch
          %464 = sbr.rel (%p462) target = $region60
        $region59: #{torch_model_forward.1} parent=11 // pred_region
          _
        $region60: #{torch_model_forward.1} parent=11 // pred_fallthru
          _
        // Predicated region
        $region61: #{torch_model_forward.1} parent=11 // pred_check
          %p465 = pneg %p325
        $region62: #{torch_model_forward.1} parent=11 // pred_check_branch
          %467 = sbr.rel (%p465) target = $region64
        $region63: #{torch_model_forward.1} parent=11 // pred_region
          _
        $region64: #{torch_model_forward.1} parent=11 // pred_fallthru
          _
        // Predicated region
        $region65: #{torch_model_forward.1} parent=11 // pred_check
          %p468 = pneg %p346
        $region66: #{torch_model_forward.1} parent=11 // pred_check_branch
          %470 = sbr.rel (%p468) target = $region68
        $region67: #{torch_model_forward.1} parent=11 // pred_region
          _
        $region68: #{torch_model_forward.1} parent=11 // pred_fallthru
          _
        // Predicated region
        $region69: #{torch_model_forward.1} parent=11 // pred_check
          %p471 = pneg %p367
        $region70: #{torch_model_forward.1} parent=11 // pred_check_branch
          %473 = sbr.rel (%p471) target = $region72
        $region71: #{torch_model_forward.1} parent=11 // pred_region
          _
        $region72: #{torch_model_forward.1} parent=11 // pred_fallthru
          _
        // Predicated region
        $region73: #{torch_model_forward.1} parent=11 // pred_check
          %p474 = pneg %p388
        $region74: #{torch_model_forward.1} parent=11 // pred_check_branch
          %476 = sbr.rel (%p474) target = $region76
        $region75: #{torch_model_forward.1} parent=11 // pred_region
          _
        $region76: #{torch_model_forward.1} parent=11 // pred_fallthru
          _
      $region12: #{torch_model_forward.1} parent=5 // pred_fallthru
        _
      %p477 = scmp.lt.s32.totalorder %s26, 2
      // Predicated region
      $region77: #{torch_model_forward.1} parent=5 // pred_check
        %p478 = pneg %p477
      $region78: #{torch_model_forward.1} parent=5 // pred_check_branch
        %480 = sbr.rel (%p478) target = $region80
      $region79: #{torch_model_forward.1} parent=5 // pred_region
        // Predicated region
        $region81: #{torch_model_forward.1} parent=79 // pred_check
          %p481 = pneg %p46
        $region82: #{torch_model_forward.1} parent=79 // pred_check_branch
          %483 = sbr.rel (%p481) target = $region84
        $region83: #{torch_model_forward.1} parent=79 // pred_region
          %p484 = scmp.lt.s32.totalorder %s26, 1
          %s485 = scalar_select %p484, %s26, 1
          %s486 = smul.addr %s485, 8
          %s487 = scalar_lea.vmem %s0, %s486
        $region84: #{torch_model_forward.1} parent=79 // pred_fallthru
          _
      $region80: #{torch_model_forward.1} parent=5 // pred_fallthru
        _
      %p488 = scmp.le.s32.totalorder 1, %s26
      %p489 = scmp.lt.s32.totalorder %s26, 3
      %p490 = pnand %p488, %p489
      %p491 = pneg %p490
      // Predicated region
      $region85: #{torch_model_forward.1} parent=5 // pred_check
        _
      $region86: #{torch_model_forward.1} parent=5 // pred_check_branch
        %493 = sbr.rel (%p490) target = $region88
      $region87: #{torch_model_forward.1} parent=5 // pred_region
        %s494 = ssub.s32 %s26, 1
        %p495 = scmp.lt.s32.totalorder %s31, 1
        %s496 = scalar_select %p495, %s31, 1
        %s497 = smul.addr %s496, 8
        %s498 = scalar_lea.vmem %s0, %s497
        %p499 = pneg %p52
        %p500 = pneg %p49
        %p501 = pneg %p73
        %p502 = pneg %p70
        %p503 = pneg %p94
        %p504 = pneg %p91
        %p505 = pneg %p115
        %p506 = pneg %p112
        %p507 = pneg %p136
        %p508 = pneg %p133
        %p509 = pneg %p157
        %p510 = pneg %p154
        %p511 = pneg %p178
        %p512 = pneg %p175
        %p513 = pneg %p199
        %p514 = pneg %p196
        %p515 = pneg %p220
        %p516 = pneg %p217
        %p517 = pneg %p241
        %p518 = pneg %p238
        %p519 = pneg %p262
        %p520 = pneg %p259
        %p521 = pneg %p283
        %p522 = pneg %p280
        %p523 = pneg %p304
        %p524 = pneg %p301
        %p525 = pneg %p325
        %p526 = pneg %p322
        %p527 = pneg %p346
        %p528 = pneg %p343
        %p529 = pneg %p367
        %p530 = pneg %p364
        %p531 = pneg %p388
        %p532 = pneg %p385
        %p533 = pneg %p414
        %p534 = pneg %p411
        %s535 = sand.u32 %s401, 1
        %s536 = scalar_lea.sflag [#allocation3], %s535
        %s537 = sand.u32 %s401, 1
        %s538 = smul.addr %s537, 8
        %s539 = scalar_lea.vmem [#allocation2], %s538
        %p540 = scmp.lt.s32.totalorder %s31, 1
        %s541 = scalar_select %p540, %s31, 1
        %s542 = smul.addr %s541, 8
        %s543 = scalar_lea.vmem %s0, %s542
        %v544 = vld [vmem:[%s543] sm:$0xff]
        %v545 = vld [vmem:[%s1] sm:$0x1]
        %v546 = vld [vmem:[%s2] sm:$0x1]
        %vm547 = vcmask 261120
        %v548 = vsel %vm547, %v544, 0.0
        %549 = vadd.xlane.f32.xlu0 %v548
        %v550 = vpop.xlane.xlu0 %549
        %v551 = vrcp.pop 32.0
        %v552 = vmul.f32 32.0, %v551
        %v553 = vsub.f32 1.0, %v552
        %v554 = vmul.f32 %v551, %v553
        %v555 = vadd.f32 %v551, %v554
        %vm556 = vweird.f32 %v551
        %v557 = vsel %vm556, %v551, %v555
        %v558 = vmul.f32 %v550, %v557
        %v559 = vsub.f32 %v544, %v558
        %v560 = vmul.f32 %v559, %v559
        %v561 = vsel %vm547, %v560, 0.0
        %562 = vadd.xlane.f32.xlu0 %v561
        %v563 = vpop.xlane.xlu0 %562
        %v564 = vmul.f32 %v563, %v557
        %v565 = vadd.f32 %v564, 1e-12
        %v566 = vrsqrt.pop %v565
        %v567 = vmul.f32 %v566, %v565
        %v568 = vmul.f32 %v567, %v566
        %v569 = vmul.f32 0.5, %v568
        %v570 = vsub.f32 1.5, %v569
        %v571 = vmul.f32 %v566, %v570
        %vm572 = vweird.f32 %v565
        %vm573 = vweird.f32 %v566
        %vm574 = vmor %vm572, %vm573
        %v575 = vsel %vm574, %v566, %v571
        %v576 = vmul.f32 %v559, %v575
        %v578 = vperm.slane %v545, 0
        %v580 = vmul.f32 %v576, %v578
        %v582 = vperm.slane %v546, 0
        %v584 = vadd.f32 %v580, %v582
        %v585 = vld [vmem:[%s3] sm:$0xff]
        %v586 = vld [vmem:[%s3 + $0x8] sm:$0xff]
        %v587 = vld [vmem:[%s3 + $0x10] sm:$0xff]
        %v588 = vld [vmem:[%s3 + $0x18] sm:$0xff]
        %v589 = vld [vmem:[%s4] sm:$0x1]
        %v591 = vperm.slane %v589, 0
        %v594 = vsel %vm547, %v584, 0
        %596 = vmatpush.msra.mxu0 0.0
        %597 = vmatpush.msra.mxu0 0.0
        %598 = vmatpush.msra.mxu0 0.0
        %599 = vmatpush.msra.mxu0 0.0
        %600 = vmatpush.msra.mxu0 0.0
        %601 = vmatpush.msra.mxu0 0.0
        %602 = vmatpush.msra.mxu0 0.0
        %603 = vmatpush.msra.mxu0 0.0
        %604 = vmatpush.msra.mxu0 0.0
        %605 = vmatpush.msra.mxu0 0.0
        %606 = vmatpush.msra.mxu0 0.0
        %607 = vmatpush.msra.mxu0 0.0
        %608 = vmatpush.msra.mxu0 %v588
        %609 = vmatpush.msra.mxu0 %v587
        %610 = vmatpush.msra.mxu0 %v586
        %611 = vmatpush.msra.mxu0 %v585
        %612 = vmatmul.f32.gmra.mxu0 %v594
        %v613 = vpop.f32.mrf.mxu0
        %v614 = vadd.f32 %v591, %v613
        %615 = vdwg.mxu0
        %v616 = vld [vmem:[%s5] sm:$0xff]
        %v617 = vld [vmem:[%s5 + $0x8] sm:$0xff]
        %v618 = vld [vmem:[%s5 + $0x10] sm:$0xff]
        %v619 = vld [vmem:[%s5 + $0x18] sm:$0xff]
        %v620 = vld [vmem:[%s6] sm:$0x1]
        %622 = vrot.lane.b32.xlu0 %v614, 96
        %v623 = vpop.permute.xlu0 %622
        %vm624 = vcmask 64512
        %v625 = vsel %vm624, %v614, 0
        %v627 = vsel %vm624, %v623, 0
        %629 = vmatpush.xpose.msra.mxu0 0.0
        %630 = vmatpush.xpose.msra.mxu0 0.0
        %631 = vmatpush.xpose.msra.mxu0 0.0
        %632 = vmatpush.xpose.msra.mxu0 0.0
        %633 = vmatpush.xpose.msra.mxu0 0.0
        %634 = vmatpush.xpose.msra.mxu0 0.0
        %635 = vmatpush.xpose.msra.mxu0 0.0
        %636 = vmatpush.xpose.msra.mxu0 0.0
        %637 = vmatpush.xpose.msra.mxu0 0.0
        %638 = vmatpush.xpose.msra.mxu0 0.0
        %639 = vmatpush.xpose.msra.mxu0 0.0
        %640 = vmatpush.xpose.msra.mxu0 0.0
        %641 = vmatpush.xpose.msra.mxu0 0.0
        %642 = vmatpush.xpose.msra.mxu0 0.0
        %643 = vmatpush.xpose.msra.mxu0 0.0
        %644 = vmatpush.xpose.msra.mxu0 %v627
        %645 = vmatmul.f32.gmra.mxu0 %v625
        %v646 = vpop.f32.mrf.mxu0
        %v647 = vadd.f32 0.0, %v646
        %648 = vdwg.mxu0
        %v649 = vmul.f32 %v647, 0.35355338
        %v650 = vsel %vm624, %v649, -inf
        %651 = vmax.xlane.f32.xlu0 %v650
        %v652 = vpop.xlane.xlu0 %651
        %v653 = vsub.f32 %v649, %v652
        %v654 = vmul.f32 %v653, 1.442695
        %v655 = vpow.pop %v654
        %v656 = vsel %vm624, %v655, 0.0
        %657 = vadd.xlane.f32.xlu0 %v656
        %v658 = vpop.xlane.xlu0 %657
        %v659 = vrcp.pop %v658
        %v660 = vmul.f32 %v655, %v659
        %661 = vrot.lane.b32.xlu0 %v614, 64
        %v662 = vpop.permute.xlu0 %661
        %v665 = vsel %vm624, %v660, 0
        %667 = vmatpush.msra.mxu0 0.0
        %668 = vmatpush.msra.mxu0 0.0
        %669 = vmatpush.msra.mxu0 0.0
        %670 = vmatpush.msra.mxu0 0.0
        %671 = vmatpush.msra.mxu0 0.0
        %672 = vmatpush.msra.mxu0 0.0
        %673 = vmatpush.msra.mxu0 0.0
        %674 = vmatpush.msra.mxu0 0.0
        %675 = vmatpush.msra.mxu0 0.0
        %676 = vmatpush.msra.mxu0 0.0
        %677 = vmatpush.msra.mxu0 0.0
        %678 = vmatpush.msra.mxu0 0.0
        %679 = vmatpush.msra.mxu0 0.0
        %680 = vmatpush.msra.mxu0 0.0
        %681 = vmatpush.msra.mxu0 0.0
        %682 = vmatpush.msra.mxu0 %v662
        %683 = vmatmul.f32.gmra.mxu0 %v665
        %v684 = vpop.f32.mrf.mxu0
        %v685 = vadd.f32 0.0, %v684
        %686 = vdwg.mxu0
        %v688 = vsel %vm624, %v685, 0
        %690 = vmatpush.msra.mxu0 0.0
        %691 = vmatpush.msra.mxu0 0.0
        %692 = vmatpush.msra.mxu0 0.0
        %693 = vmatpush.msra.mxu0 0.0
        %694 = vmatpush.msra.mxu0 0.0
        %695 = vmatpush.msra.mxu0 0.0
        %696 = vmatpush.msra.mxu0 0.0
        %697 = vmatpush.msra.mxu0 0.0
        %698 = vmatpush.msra.mxu0 0.0
        %699 = vmatpush.msra.mxu0 0.0
        %700 = vmatpush.msra.mxu0 0.0
        %701 = vmatpush.msra.mxu0 0.0
        %702 = vmatpush.msra.mxu0 0.0
        %703 = vmatpush.msra.mxu0 0.0
        %704 = vmatpush.msra.mxu0 0.0
        %705 = vmatpush.msra.mxu0 %v616
        %706 = vmatmul.f32.gmra.mxu0 %v688
        %v707 = vpop.f32.mrf.mxu0
        %v708 = vadd.f32 0.0, %v707
        %709 = vdwg.mxu0
        %v711 = vperm.slane %v620, 0
        %v713 = vadd.f32 %v711, %v708
        %714 = vrot.lane.b32.xlu0 %v614, 120
        %v715 = vpop.permute.xlu0 %714
        %716 = vrot.lane.b32.xlu0 %v614, 88
        %v717 = vpop.permute.xlu0 %716
        %v718 = vsel %vm624, %v715, 0
        %v720 = vsel %vm624, %v717, 0
        %722 = vmatpush.xpose.msra.mxu0 0.0
        %723 = vmatpush.xpose.msra.mxu0 0.0
        %724 = vmatpush.xpose.msra.mxu0 0.0
        %725 = vmatpush.xpose.msra.mxu0 0.0
        %726 = vmatpush.xpose.msra.mxu0 0.0
        %727 = vmatpush.xpose.msra.mxu0 0.0
        %728 = vmatpush.xpose.msra.mxu0 0.0
        %729 = vmatpush.xpose.msra.mxu0 0.0
        %730 = vmatpush.xpose.msra.mxu0 0.0
        %731 = vmatpush.xpose.msra.mxu0 0.0
        %732 = vmatpush.xpose.msra.mxu0 0.0
        %733 = vmatpush.xpose.msra.mxu0 0.0
        %734 = vmatpush.xpose.msra.mxu0 0.0
        %735 = vmatpush.xpose.msra.mxu0 0.0
        %736 = vmatpush.xpose.msra.mxu0 0.0
        %737 = vmatpush.xpose.msra.mxu0 %v720
        %738 = vmatmul.f32.gmra.mxu0 %v718
        %v739 = vpop.f32.mrf.mxu0
        %v740 = vadd.f32 0.0, %v739
        %741 = vdwg.mxu0
        %v742 = vmul.f32 %v740, 0.35355338
        %v743 = vsel %vm624, %v742, -inf
        %744 = vmax.xlane.f32.xlu0 %v743
        %v745 = vpop.xlane.xlu0 %744
        %v746 = vsub.f32 %v742, %v745
        %v747 = vmul.f32 %v746, 1.442695
        %v748 = vpow.pop %v747
        %v749 = vsel %vm624, %v748, 0.0
        %750 = vadd.xlane.f32.xlu0 %v749
        %v751 = vpop.xlane.xlu0 %750
        %v752 = vrcp.pop %v751
        %v753 = vmul.f32 %v748, %v752
        %754 = vrot.lane.b32.xlu0 %v614, 56
        %v755 = vpop.permute.xlu0 %754
        %v758 = vsel %vm624, %v753, 0
        %760 = vmatpush.msra.mxu0 0.0
        %761 = vmatpush.msra.mxu0 0.0
        %762 = vmatpush.msra.mxu0 0.0
        %763 = vmatpush.msra.mxu0 0.0
        %764 = vmatpush.msra.mxu0 0.0
        %765 = vmatpush.msra.mxu0 0.0
        %766 = vmatpush.msra.mxu0 0.0
        %767 = vmatpush.msra.mxu0 0.0
        %768 = vmatpush.msra.mxu0 0.0
        %769 = vmatpush.msra.mxu0 0.0
        %770 = vmatpush.msra.mxu0 0.0
        %771 = vmatpush.msra.mxu0 0.0
        %772 = vmatpush.msra.mxu0 0.0
        %773 = vmatpush.msra.mxu0 0.0
        %774 = vmatpush.msra.mxu0 0.0
        %775 = vmatpush.msra.mxu0 %v755
        %776 = vmatmul.f32.gmra.mxu0 %v758
        %v777 = vpop.f32.mrf.mxu0
        %v778 = vadd.f32 0.0, %v777
        %779 = vdwg.mxu0
        %v781 = vsel %vm624, %v778, 0
        %783 = vmatpush.msra.mxu0 0.0
        %784 = vmatpush.msra.mxu0 0.0
        %785 = vmatpush.msra.mxu0 0.0
        %786 = vmatpush.msra.mxu0 0.0
        %787 = vmatpush.msra.mxu0 0.0
        %788 = vmatpush.msra.mxu0 0.0
        %789 = vmatpush.msra.mxu0 0.0
        %790 = vmatpush.msra.mxu0 0.0
        %791 = vmatpush.msra.mxu0 0.0
        %792 = vmatpush.msra.mxu0 0.0
        %793 = vmatpush.msra.mxu0 0.0
        %794 = vmatpush.msra.mxu0 0.0
        %795 = vmatpush.msra.mxu0 0.0
        %796 = vmatpush.msra.mxu0 0.0
        %797 = vmatpush.msra.mxu0 0.0
        %798 = vmatpush.msra.mxu0 %v617
        %799 = vmatmul.f32.gmra.mxu0 %v781
        %v800 = vpop.f32.mrf.mxu0
        %v801 = vadd.f32 0.0, %v800
        %802 = vdwg.mxu0
        %v803 = vadd.f32 %v713, %v801
        %804 = vrot.lane.b32.xlu0 %v614, 112
        %v805 = vpop.permute.xlu0 %804
        %806 = vrot.lane.b32.xlu0 %v614, 80
        %v807 = vpop.permute.xlu0 %806
        %v808 = vsel %vm624, %v805, 0
        %v810 = vsel %vm624, %v807, 0
        %812 = vmatpush.xpose.msra.mxu0 0.0
        %813 = vmatpush.xpose.msra.mxu0 0.0
        %814 = vmatpush.xpose.msra.mxu0 0.0
        %815 = vmatpush.xpose.msra.mxu0 0.0
        %816 = vmatpush.xpose.msra.mxu0 0.0
        %817 = vmatpush.xpose.msra.mxu0 0.0
        %818 = vmatpush.xpose.msra.mxu0 0.0
        %819 = vmatpush.xpose.msra.mxu0 0.0
        %820 = vmatpush.xpose.msra.mxu0 0.0
        %821 = vmatpush.xpose.msra.mxu0 0.0
        %822 = vmatpush.xpose.msra.mxu0 0.0
        %823 = vmatpush.xpose.msra.mxu0 0.0
        %824 = vmatpush.xpose.msra.mxu0 0.0
        %825 = vmatpush.xpose.msra.mxu0 0.0
        %826 = vmatpush.xpose.msra.mxu0 0.0
        %827 = vmatpush.xpose.msra.mxu0 %v810
        %828 = vmatmul.f32.gmra.mxu0 %v808
        %v829 = vpop.f32.mrf.mxu0
        %v830 = vadd.f32 0.0, %v829
        %831 = vdwg.mxu0
        %v832 = vmul.f32 %v830, 0.35355338
        %v833 = vsel %vm624, %v832, -inf
        %834 = vmax.xlane.f32.xlu0 %v833
        %v835 = vpop.xlane.xlu0 %834
        %v836 = vsub.f32 %v832, %v835
        %v837 = vmul.f32 %v836, 1.442695
        %v838 = vpow.pop %v837
        %v839 = vsel %vm624, %v838, 0.0
        %840 = vadd.xlane.f32.xlu0 %v839
        %v841 = vpop.xlane.xlu0 %840
        %v842 = vrcp.pop %v841
        %v843 = vmul.f32 %v838, %v842
        %844 = vrot.lane.b32.xlu0 %v614, 48
        %v845 = vpop.permute.xlu0 %844
        %v848 = vsel %vm624, %v843, 0
        %850 = vmatpush.msra.mxu0 0.0
        %851 = vmatpush.msra.mxu0 0.0
        %852 = vmatpush.msra.mxu0 0.0
        %853 = vmatpush.msra.mxu0 0.0
        %854 = vmatpush.msra.mxu0 0.0
        %855 = vmatpush.msra.mxu0 0.0
        %856 = vmatpush.msra.mxu0 0.0
        %857 = vmatpush.msra.mxu0 0.0
        %858 = vmatpush.msra.mxu0 0.0
        %859 = vmatpush.msra.mxu0 0.0
        %860 = vmatpush.msra.mxu0 0.0
        %861 = vmatpush.msra.mxu0 0.0
        %862 = vmatpush.msra.mxu0 0.0
        %863 = vmatpush.msra.mxu0 0.0
        %864 = vmatpush.msra.mxu0 0.0
        %865 = vmatpush.msra.mxu0 %v845
        %866 = vmatmul.f32.gmra.mxu0 %v848
        %v867 = vpop.f32.mrf.mxu0
        %v868 = vadd.f32 0.0, %v867
        %869 = vdwg.mxu0
        %v871 = vsel %vm624, %v868, 0
        %873 = vmatpush.msra.mxu0 0.0
        %874 = vmatpush.msra.mxu0 0.0
        %875 = vmatpush.msra.mxu0 0.0
        %876 = vmatpush.msra.mxu0 0.0
        %877 = vmatpush.msra.mxu0 0.0
        %878 = vmatpush.msra.mxu0 0.0
        %879 = vmatpush.msra.mxu0 0.0
        %880 = vmatpush.msra.mxu0 0.0
        %881 = vmatpush.msra.mxu0 0.0
        %882 = vmatpush.msra.mxu0 0.0
        %883 = vmatpush.msra.mxu0 0.0
        %884 = vmatpush.msra.mxu0 0.0
        %885 = vmatpush.msra.mxu0 0.0
        %886 = vmatpush.msra.mxu0 0.0
        %887 = vmatpush.msra.mxu0 0.0
        %888 = vmatpush.msra.mxu0 %v618
        %889 = vmatmul.f32.gmra.mxu0 %v871
        %v890 = vpop.f32.mrf.mxu0
        %v891 = vadd.f32 0.0, %v890
        %892 = vdwg.mxu0
        %v893 = vadd.f32 %v803, %v891
        %894 = vrot.lane.b32.xlu0 %v614, 104
        %v895 = vpop.permute.xlu0 %894
        %896 = vrot.lane.b32.xlu0 %v614, 72
        %v897 = vpop.permute.xlu0 %896
        %v898 = vsel %vm624, %v895, 0
        %v900 = vsel %vm624, %v897, 0
        %902 = vmatpush.xpose.msra.mxu0 0.0
        %903 = vmatpush.xpose.msra.mxu0 0.0
        %904 = vmatpush.xpose.msra.mxu0 0.0
        %905 = vmatpush.xpose.msra.mxu0 0.0
        %906 = vmatpush.xpose.msra.mxu0 0.0
        %907 = vmatpush.xpose.msra.mxu0 0.0
        %908 = vmatpush.xpose.msra.mxu0 0.0
        %909 = vmatpush.xpose.msra.mxu0 0.0
        %910 = vmatpush.xpose.msra.mxu0 0.0
        %911 = vmatpush.xpose.msra.mxu0 0.0
        %912 = vmatpush.xpose.msra.mxu0 0.0
        %913 = vmatpush.xpose.msra.mxu0 0.0
        %914 = vmatpush.xpose.msra.mxu0 0.0
        %915 = vmatpush.xpose.msra.mxu0 0.0
        %916 = vmatpush.xpose.msra.mxu0 0.0
        %917 = vmatpush.xpose.msra.mxu0 %v900
        %918 = vmatmul.f32.gmra.mxu0 %v898
        %v919 = vpop.f32.mrf.mxu0
        %v920 = vadd.f32 0.0, %v919
        %921 = vdwg.mxu0
        %v922 = vmul.f32 %v920, 0.35355338
        %v923 = vsel %vm624, %v922, -inf
        %924 = vmax.xlane.f32.xlu0 %v923
        %v925 = vpop.xlane.xlu0 %924
        %v926 = vsub.f32 %v922, %v925
        %v927 = vmul.f32 %v926, 1.442695
        %v928 = vpow.pop %v927
        %v929 = vsel %vm624, %v928, 0.0
        %930 = vadd.xlane.f32.xlu0 %v929
        %v931 = vpop.xlane.xlu0 %930
        %v932 = vrcp.pop %v931
        %v933 = vmul.f32 %v928, %v932
        %934 = vrot.lane.b32.xlu0 %v614, 40
        %v935 = vpop.permute.xlu0 %934
        %v938 = vsel %vm624, %v933, 0
        %940 = vmatpush.msra.mxu0 0.0
        %941 = vmatpush.msra.mxu0 0.0
        %942 = vmatpush.msra.mxu0 0.0
        %943 = vmatpush.msra.mxu0 0.0
        %944 = vmatpush.msra.mxu0 0.0
        %945 = vmatpush.msra.mxu0 0.0
        %946 = vmatpush.msra.mxu0 0.0
        %947 = vmatpush.msra.mxu0 0.0
        %948 = vmatpush.msra.mxu0 0.0
        %949 = vmatpush.msra.mxu0 0.0
        %950 = vmatpush.msra.mxu0 0.0
        %951 = vmatpush.msra.mxu0 0.0
        %952 = vmatpush.msra.mxu0 0.0
        %953 = vmatpush.msra.mxu0 0.0
        %954 = vmatpush.msra.mxu0 0.0
        %955 = vmatpush.msra.mxu0 %v935
        %956 = vmatmul.f32.gmra.mxu0 %v938
        %v957 = vpop.f32.mrf.mxu0
        %v958 = vadd.f32 0.0, %v957
        %959 = vdwg.mxu0
        %v961 = vsel %vm624, %v958, 0
        %963 = vmatpush.msra.mxu0 0.0
        %964 = vmatpush.msra.mxu0 0.0
        %965 = vmatpush.msra.mxu0 0.0
        %966 = vmatpush.msra.mxu0 0.0
        %967 = vmatpush.msra.mxu0 0.0
        %968 = vmatpush.msra.mxu0 0.0
        %969 = vmatpush.msra.mxu0 0.0
        %970 = vmatpush.msra.mxu0 0.0
        %971 = vmatpush.msra.mxu0 0.0
        %972 = vmatpush.msra.mxu0 0.0
        %973 = vmatpush.msra.mxu0 0.0
        %974 = vmatpush.msra.mxu0 0.0
        %975 = vmatpush.msra.mxu0 0.0
        %976 = vmatpush.msra.mxu0 0.0
        %977 = vmatpush.msra.mxu0 0.0
        %978 = vmatpush.msra.mxu0 %v619
        %979 = vmatmul.f32.gmra.mxu0 %v961
        %v980 = vpop.f32.mrf.mxu0
        %v981 = vadd.f32 0.0, %v980
        %982 = vdwg.mxu0
        %v983 = vadd.f32 %v893, %v981
        %v984 = vadd.f32 %v983, %v584
        %v985 = vld [vmem:[%s7] sm:$0x1]
        %v986 = vld [vmem:[%s8] sm:$0x1]
        %v987 = vsel %vm547, %v984, 0.0
        %988 = vadd.xlane.f32.xlu0 %v987
        %v989 = vpop.xlane.xlu0 %988
        %v990 = vmul.f32 %v989, %v557
        %v991 = vsub.f32 %v984, %v990
        %v992 = vmul.f32 %v991, %v991
        %v993 = vsel %vm547, %v992, 0.0
        %994 = vadd.xlane.f32.xlu0 %v993
        %v995 = vpop.xlane.xlu0 %994
        %v996 = vmul.f32 %v995, %v557
        %v997 = vadd.f32 %v996, 1e-12
        %v998 = vrsqrt.pop %v997
        %v999 = vmul.f32 %v998, %v997
        %v1000 = vmul.f32 %v999, %v998
        %v1001 = vmul.f32 0.5, %v1000
        %v1002 = vsub.f32 1.5, %v1001
        %v1003 = vmul.f32 %v998, %v1002
        %vm1004 = vweird.f32 %v997
        %vm1005 = vweird.f32 %v998
        %vm1006 = vmor %vm1004, %vm1005
        %v1007 = vsel %vm1006, %v998, %v1003
        %v1008 = vmul.f32 %v991, %v1007
        %v1010 = vperm.slane %v985, 0
        %v1012 = vmul.f32 %v1008, %v1010
        %v1014 = vperm.slane %v986, 0
        %v1016 = vadd.f32 %v1012, %v1014
        %v1017 = vld [vmem:[%s9] sm:$0xff]
        %v1018 = vld [vmem:[%s9 + $0x8] sm:$0xff]
        %v1019 = vld [vmem:[%s9 + $0x10] sm:$0xff]
        %v1020 = vld [vmem:[%s9 + $0x18] sm:$0xff]
        %v1021 = vld [vmem:[%s10] sm:$0x1]
        %v1023 = vperm.slane %v1021, 0
        %v1026 = vsel %vm547, %v1016, 0
        %1028 = vmatpush.msra.mxu0 0.0
        %1029 = vmatpush.msra.mxu0 0.0
        %1030 = vmatpush.msra.mxu0 0.0
        %1031 = vmatpush.msra.mxu0 0.0
        %1032 = vmatpush.msra.mxu0 0.0
        %1033 = vmatpush.msra.mxu0 0.0
        %1034 = vmatpush.msra.mxu0 0.0
        %1035 = vmatpush.msra.mxu0 0.0
        %1036 = vmatpush.msra.mxu0 0.0
        %1037 = vmatpush.msra.mxu0 0.0
        %1038 = vmatpush.msra.mxu0 0.0
        %1039 = vmatpush.msra.mxu0 0.0
        %1040 = vmatpush.msra.mxu0 %v1020
        %1041 = vmatpush.msra.mxu0 %v1019
        %1042 = vmatpush.msra.mxu0 %v1018
        %1043 = vmatpush.msra.mxu0 %v1017
        %1044 = vmatmul.f32.gmra.mxu0 %v1026
        %v1045 = vpop.f32.mrf.mxu0
        %v1046 = vadd.f32 %v1023, %v1045
        %1047 = vdwg.mxu0
        %v1048 = vmul.f32 %v1046, 0.5
        %v1049 = vmul.f32 %v1046, 0.044715
        %v1050 = vmul.f32 %v1049, %v1046
        %v1051 = vmul.f32 %v1050, %v1046
        %v1052 = vadd.f32 %v1046, %v1051
        %v1053 = vmul.f32 %v1052, 0.7978846
        %v1054 = vtanh.pop %v1053
        %v1055 = vadd.f32 %v1054, 1.0
        %v1056 = vmul.f32 %v1048, %v1055
        %v1057 = vld [vmem:[%s11] sm:$0xff]
        %v1058 = vld [vmem:[%s11 + $0x8] sm:$0xff]
        %v1059 = vld [vmem:[%s11 + $0x10] sm:$0xff]
        %v1060 = vld [vmem:[%s11 + $0x18] sm:$0xff]
        %v1061 = vld [vmem:[%s11 + $0x20] sm:$0xff]
        %v1062 = vld [vmem:[%s11 + $0x28] sm:$0xff]
        %v1063 = vld [vmem:[%s11 + $0x30] sm:$0xff]
        %v1064 = vld [vmem:[%s11 + $0x38] sm:$0xff]
        %v1065 = vld [vmem:[%s12] sm:$0x1]
        %v1067 = vperm.slane %v1065, 0
        %vm1069 = vcmask 523264
        %v1071 = vsel %vm1069, %v1056, 0
        %1073 = vmatpush.msra.mxu0 0.0
        %1074 = vmatpush.msra.mxu0 0.0
        %1075 = vmatpush.msra.mxu0 0.0
        %1076 = vmatpush.msra.mxu0 0.0
        %1077 = vmatpush.msra.mxu0 0.0
        %1078 = vmatpush.msra.mxu0 0.0
        %1079 = vmatpush.msra.mxu0 0.0
        %1080 = vmatpush.msra.mxu0 0.0
        %1081 = vmatpush.msra.mxu0 %v1064
        %1082 = vmatpush.msra.mxu0 %v1063
        %1083 = vmatpush.msra.mxu0 %v1062
        %1084 = vmatpush.msra.mxu0 %v1061
        %1085 = vmatpush.msra.mxu0 %v1060
        %1086 = vmatpush.msra.mxu0 %v1059
        %1087 = vmatpush.msra.mxu0 %v1058
        %1088 = vmatpush.msra.mxu0 %v1057
        %1089 = vmatmul.f32.gmra.mxu0 %v1071
        %v1090 = vpop.f32.mrf.mxu0
        %v1091 = vadd.f32 %v1067, %v1090
        %1092 = vdwg.mxu0
        %v1093 = vadd.f32 %v1091, %v1016
        %v1094 = vld [vmem:[%s13] sm:$0x1]
        %v1095 = vld [vmem:[%s14] sm:$0x1]
        %v1096 = vsel %vm547, %v1093, 0.0
        %1097 = vadd.xlane.f32.xlu0 %v1096
        %v1098 = vpop.xlane.xlu0 %1097
        %v1099 = vmul.f32 %v1098, %v557
        %v1100 = vsub.f32 %v1093, %v1099
        %v1101 = vmul.f32 %v1100, %v1100
        %v1102 = vsel %vm547, %v1101, 0.0
        %1103 = vadd.xlane.f32.xlu0 %v1102
        %v1104 = vpop.xlane.xlu0 %1103
        %v1105 = vmul.f32 %v1104, %v557
        %v1106 = vadd.f32 %v1105, 1e-12
        %v1107 = vrsqrt.pop %v1106
        %v1108 = vmul.f32 %v1107, %v1106
        %v1109 = vmul.f32 %v1108, %v1107
        %v1110 = vmul.f32 0.5, %v1109
        %v1111 = vsub.f32 1.5, %v1110
        %v1112 = vmul.f32 %v1107, %v1111
        %vm1113 = vweird.f32 %v1106
        %vm1114 = vweird.f32 %v1107
        %vm1115 = vmor %vm1113, %vm1114
        %v1116 = vsel %vm1115, %v1107, %v1112
        %v1117 = vmul.f32 %v1100, %v1116
        %v1119 = vperm.slane %v1094, 0
        %v1121 = vmul.f32 %v1117, %v1119
        %v1123 = vperm.slane %v1095, 0
        %v1125 = vadd.f32 %v1121, %v1123
        %s1126 = scalar_lea.vmem %s3, 32
        %v1127 = vld [vmem:[%s1126] sm:$0xff]
        %v1128 = vld [vmem:[%s1126 + $0x8] sm:$0xff]
        %v1129 = vld [vmem:[%s1126 + $0x10] sm:$0xff]
        %v1130 = vld [vmem:[%s1126 + $0x18] sm:$0xff]
        %s1131 = scalar_lea.vmem %s4, 1
        %v1132 = vld [vmem:[%s1131] sm:$0x1]
        %v1134 = vperm.slane %v1132, 0
        %v1137 = vsel %vm547, %v1125, 0
        %1139 = vmatpush.msra.mxu0 0.0
        %1140 = vmatpush.msra.mxu0 0.0
        %1141 = vmatpush.msra.mxu0 0.0
        %1142 = vmatpush.msra.mxu0 0.0
        %1143 = vmatpush.msra.mxu0 0.0
        %1144 = vmatpush.msra.mxu0 0.0
        %1145 = vmatpush.msra.mxu0 0.0
        %1146 = vmatpush.msra.mxu0 0.0
        %1147 = vmatpush.msra.mxu0 0.0
        %1148 = vmatpush.msra.mxu0 0.0
        %1149 = vmatpush.msra.mxu0 0.0
        %1150 = vmatpush.msra.mxu0 0.0
        %1151 = vmatpush.msra.mxu0 %v1130
        %1152 = vmatpush.msra.mxu0 %v1129
        %1153 = vmatpush.msra.mxu0 %v1128
        %1154 = vmatpush.msra.mxu0 %v1127
        %1155 = vmatmul.f32.gmra.mxu0 %v1137
        %v1156 = vpop.f32.mrf.mxu0
        %v1157 = vadd.f32 %v1134, %v1156
        %1158 = vdwg.mxu0
        %s1159 = scalar_lea.vmem %s5, 32
        %v1160 = vld [vmem:[%s1159] sm:$0xff]
        %v1161 = vld [vmem:[%s1159 + $0x8] sm:$0xff]
        %v1162 = vld [vmem:[%s1159 + $0x10] sm:$0xff]
        %v1163 = vld [vmem:[%s1159 + $0x18] sm:$0xff]
        %s1164 = scalar_lea.vmem %s6, 1
        %v1165 = vld [vmem:[%s1164] sm:$0x1]
        %1167 = vrot.lane.b32.xlu0 %v1157, 96
        %v1168 = vpop.permute.xlu0 %1167
        %v1169 = vsel %vm624, %v1157, 0
        %v1171 = vsel %vm624, %v1168, 0
        %1173 = vmatpush.xpose.msra.mxu0 0.0
        %1174 = vmatpush.xpose.msra.mxu0 0.0
        %1175 = vmatpush.xpose.msra.mxu0 0.0
        %1176 = vmatpush.xpose.msra.mxu0 0.0
        %1177 = vmatpush.xpose.msra.mxu0 0.0
        %1178 = vmatpush.xpose.msra.mxu0 0.0
        %1179 = vmatpush.xpose.msra.mxu0 0.0
        %1180 = vmatpush.xpose.msra.mxu0 0.0
        %1181 = vmatpush.xpose.msra.mxu0 0.0
        %1182 = vmatpush.xpose.msra.mxu0 0.0
        %1183 = vmatpush.xpose.msra.mxu0 0.0
        %1184 = vmatpush.xpose.msra.mxu0 0.0
        %1185 = vmatpush.xpose.msra.mxu0 0.0
        %1186 = vmatpush.xpose.msra.mxu0 0.0
        %1187 = vmatpush.xpose.msra.mxu0 0.0
        %1188 = vmatpush.xpose.msra.mxu0 %v1171
        %1189 = vmatmul.f32.gmra.mxu0 %v1169
        %v1190 = vpop.f32.mrf.mxu0
        %v1191 = vadd.f32 0.0, %v1190
        %1192 = vdwg.mxu0
        %v1193 = vmul.f32 %v1191, 0.35355338
        %v1194 = vsel %vm624, %v1193, -inf
        %1195 = vmax.xlane.f32.xlu0 %v1194
        %v1196 = vpop.xlane.xlu0 %1195
        %v1197 = vsub.f32 %v1193, %v1196
        %v1198 = vmul.f32 %v1197, 1.442695
        %v1199 = vpow.pop %v1198
        %v1200 = vsel %vm624, %v1199, 0.0
        %1201 = vadd.xlane.f32.xlu0 %v1200
        %v1202 = vpop.xlane.xlu0 %1201
        %v1203 = vrcp.pop %v1202
        %v1204 = vmul.f32 %v1199, %v1203
        %1205 = vrot.lane.b32.xlu0 %v1157, 64
        %v1206 = vpop.permute.xlu0 %1205
        %v1209 = vsel %vm624, %v1204, 0
        %1211 = vmatpush.msra.mxu0 0.0
        %1212 = vmatpush.msra.mxu0 0.0
        %1213 = vmatpush.msra.mxu0 0.0
        %1214 = vmatpush.msra.mxu0 0.0
        %1215 = vmatpush.msra.mxu0 0.0
        %1216 = vmatpush.msra.mxu0 0.0
        %1217 = vmatpush.msra.mxu0 0.0
        %1218 = vmatpush.msra.mxu0 0.0
        %1219 = vmatpush.msra.mxu0 0.0
        %1220 = vmatpush.msra.mxu0 0.0
        %1221 = vmatpush.msra.mxu0 0.0
        %1222 = vmatpush.msra.mxu0 0.0
        %1223 = vmatpush.msra.mxu0 0.0
        %1224 = vmatpush.msra.mxu0 0.0
        %1225 = vmatpush.msra.mxu0 0.0
        %1226 = vmatpush.msra.mxu0 %v1206
        %1227 = vmatmul.f32.gmra.mxu0 %v1209
        %v1228 = vpop.f32.mrf.mxu0
        %v1229 = vadd.f32 0.0, %v1228
        %1230 = vdwg.mxu0
        %v1232 = vsel %vm624, %v1229, 0
        %1234 = vmatpush.msra.mxu0 0.0
        %1235 = vmatpush.msra.mxu0 0.0
        %1236 = vmatpush.msra.mxu0 0.0
        %1237 = vmatpush.msra.mxu0 0.0
        %1238 = vmatpush.msra.mxu0 0.0
        %1239 = vmatpush.msra.mxu0 0.0
        %1240 = vmatpush.msra.mxu0 0.0
        %1241 = vmatpush.msra.mxu0 0.0
        %1242 = vmatpush.msra.mxu0 0.0
        %1243 = vmatpush.msra.mxu0 0.0
        %1244 = vmatpush.msra.mxu0 0.0
        %1245 = vmatpush.msra.mxu0 0.0
        %1246 = vmatpush.msra.mxu0 0.0
        %1247 = vmatpush.msra.mxu0 0.0
        %1248 = vmatpush.msra.mxu0 0.0
        %1249 = vmatpush.msra.mxu0 %v1160
        %1250 = vmatmul.f32.gmra.mxu0 %v1232
        %v1251 = vpop.f32.mrf.mxu0
        %v1252 = vadd.f32 0.0, %v1251
        %1253 = vdwg.mxu0
        %v1255 = vperm.slane %v1165, 0
        %v1257 = vadd.f32 %v1255, %v1252
        %1258 = vrot.lane.b32.xlu0 %v1157, 120
        %v1259 = vpop.permute.xlu0 %1258
        %1260 = vrot.lane.b32.xlu0 %v1157, 88
        %v1261 = vpop.permute.xlu0 %1260
        %v1262 = vsel %vm624, %v1259, 0
        %v1264 = vsel %vm624, %v1261, 0
        %1266 = vmatpush.xpose.msra.mxu0 0.0
        %1267 = vmatpush.xpose.msra.mxu0 0.0
        %1268 = vmatpush.xpose.msra.mxu0 0.0
        %1269 = vmatpush.xpose.msra.mxu0 0.0
        %1270 = vmatpush.xpose.msra.mxu0 0.0
        %1271 = vmatpush.xpose.msra.mxu0 0.0
        %1272 = vmatpush.xpose.msra.mxu0 0.0
        %1273 = vmatpush.xpose.msra.mxu0 0.0
        %1274 = vmatpush.xpose.msra.mxu0 0.0
        %1275 = vmatpush.xpose.msra.mxu0 0.0
        %1276 = vmatpush.xpose.msra.mxu0 0.0
        %1277 = vmatpush.xpose.msra.mxu0 0.0
        %1278 = vmatpush.xpose.msra.mxu0 0.0
        %1279 = vmatpush.xpose.msra.mxu0 0.0
        %1280 = vmatpush.xpose.msra.mxu0 0.0
        %1281 = vmatpush.xpose.msra.mxu0 %v1264
        %1282 = vmatmul.f32.gmra.mxu0 %v1262
        %v1283 = vpop.f32.mrf.mxu0
        %v1284 = vadd.f32 0.0, %v1283
        %1285 = vdwg.mxu0
        %v1286 = vmul.f32 %v1284, 0.35355338
        %v1287 = vsel %vm624, %v1286, -inf
        %1288 = vmax.xlane.f32.xlu0 %v1287
        %v1289 = vpop.xlane.xlu0 %1288
        %v1290 = vsub.f32 %v1286, %v1289
        %v1291 = vmul.f32 %v1290, 1.442695
        %v1292 = vpow.pop %v1291
        %v1293 = vsel %vm624, %v1292, 0.0
        %1294 = vadd.xlane.f32.xlu0 %v1293
        %v1295 = vpop.xlane.xlu0 %1294
        %v1296 = vrcp.pop %v1295
        %v1297 = vmul.f32 %v1292, %v1296
        %1298 = vrot.lane.b32.xlu0 %v1157, 56
        %v1299 = vpop.permute.xlu0 %1298
        %v1302 = vsel %vm624, %v1297, 0
        %1304 = vmatpush.msra.mxu0 0.0
        %1305 = vmatpush.msra.mxu0 0.0
        %1306 = vmatpush.msra.mxu0 0.0
        %1307 = vmatpush.msra.mxu0 0.0
        %1308 = vmatpush.msra.mxu0 0.0
        %1309 = vmatpush.msra.mxu0 0.0
        %1310 = vmatpush.msra.mxu0 0.0
        %1311 = vmatpush.msra.mxu0 0.0
        %1312 = vmatpush.msra.mxu0 0.0
        %1313 = vmatpush.msra.mxu0 0.0
        %1314 = vmatpush.msra.mxu0 0.0
        %1315 = vmatpush.msra.mxu0 0.0
        %1316 = vmatpush.msra.mxu0 0.0
        %1317 = vmatpush.msra.mxu0 0.0
        %1318 = vmatpush.msra.mxu0 0.0
        %1319 = vmatpush.msra.mxu0 %v1299
        %1320 = vmatmul.f32.gmra.mxu0 %v1302
        %v1321 = vpop.f32.mrf.mxu0
        %v1322 = vadd.f32 0.0, %v1321
        %1323 = vdwg.mxu0
        %v1325 = vsel %vm624, %v1322, 0
        %1327 = vmatpush.msra.mxu0 0.0
        %1328 = vmatpush.msra.mxu0 0.0
        %1329 = vmatpush.msra.mxu0 0.0
        %1330 = vmatpush.msra.mxu0 0.0
        %1331 = vmatpush.msra.mxu0 0.0
        %1332 = vmatpush.msra.mxu0 0.0
        %1333 = vmatpush.msra.mxu0 0.0
        %1334 = vmatpush.msra.mxu0 0.0
        %1335 = vmatpush.msra.mxu0 0.0
        %1336 = vmatpush.msra.mxu0 0.0
        %1337 = vmatpush.msra.mxu0 0.0
        %1338 = vmatpush.msra.mxu0 0.0
        %1339 = vmatpush.msra.mxu0 0.0
        %1340 = vmatpush.msra.mxu0 0.0
        %1341 = vmatpush.msra.mxu0 0.0
        %1342 = vmatpush.msra.mxu0 %v1161
        %1343 = vmatmul.f32.gmra.mxu0 %v1325
        %v1344 = vpop.f32.mrf.mxu0
        %v1345 = vadd.f32 0.0, %v1344
        %1346 = vdwg.mxu0
        %v1347 = vadd.f32 %v1257, %v1345
        %1348 = vrot.lane.b32.xlu0 %v1157, 112
        %v1349 = vpop.permute.xlu0 %1348
        %1350 = vrot.lane.b32.xlu0 %v1157, 80
        %v1351 = vpop.permute.xlu0 %1350
        %v1352 = vsel %vm624, %v1349, 0
        %v1354 = vsel %vm624, %v1351, 0
        %1356 = vmatpush.xpose.msra.mxu0 0.0
        %1357 = vmatpush.xpose.msra.mxu0 0.0
        %1358 = vmatpush.xpose.msra.mxu0 0.0
        %1359 = vmatpush.xpose.msra.mxu0 0.0
        %1360 = vmatpush.xpose.msra.mxu0 0.0
        %1361 = vmatpush.xpose.msra.mxu0 0.0
        %1362 = vmatpush.xpose.msra.mxu0 0.0
        %1363 = vmatpush.xpose.msra.mxu0 0.0
        %1364 = vmatpush.xpose.msra.mxu0 0.0
        %1365 = vmatpush.xpose.msra.mxu0 0.0
        %1366 = vmatpush.xpose.msra.mxu0 0.0
        %1367 = vmatpush.xpose.msra.mxu0 0.0
        %1368 = vmatpush.xpose.msra.mxu0 0.0
        %1369 = vmatpush.xpose.msra.mxu0 0.0
        %1370 = vmatpush.xpose.msra.mxu0 0.0
        %1371 = vmatpush.xpose.msra.mxu0 %v1354
        %1372 = vmatmul.f32.gmra.mxu0 %v1352
        %v1373 = vpop.f32.mrf.mxu0
        %v1374 = vadd.f32 0.0, %v1373
        %1375 = vdwg.mxu0
        %v1376 = vmul.f32 %v1374, 0.35355338
        %v1377 = vsel %vm624, %v1376, -inf
        %1378 = vmax.xlane.f32.xlu0 %v1377
        %v1379 = vpop.xlane.xlu0 %1378
        %v1380 = vsub.f32 %v1376, %v1379
        %v1381 = vmul.f32 %v1380, 1.442695
        %v1382 = vpow.pop %v1381
        %v1383 = vsel %vm624, %v1382, 0.0
        %1384 = vadd.xlane.f32.xlu0 %v1383
        %v1385 = vpop.xlane.xlu0 %1384
        %v1386 = vrcp.pop %v1385
        %v1387 = vmul.f32 %v1382, %v1386
        %1388 = vrot.lane.b32.xlu0 %v1157, 48
        %v1389 = vpop.permute.xlu0 %1388
        %v1392 = vsel %vm624, %v1387, 0
        %1394 = vmatpush.msra.mxu0 0.0
        %1395 = vmatpush.msra.mxu0 0.0
        %1396 = vmatpush.msra.mxu0 0.0
        %1397 = vmatpush.msra.mxu0 0.0
        %1398 = vmatpush.msra.mxu0 0.0
        %1399 = vmatpush.msra.mxu0 0.0
        %1400 = vmatpush.msra.mxu0 0.0
        %1401 = vmatpush.msra.mxu0 0.0
        %1402 = vmatpush.msra.mxu0 0.0
        %1403 = vmatpush.msra.mxu0 0.0
        %1404 = vmatpush.msra.mxu0 0.0
        %1405 = vmatpush.msra.mxu0 0.0
        %1406 = vmatpush.msra.mxu0 0.0
        %1407 = vmatpush.msra.mxu0 0.0
        %1408 = vmatpush.msra.mxu0 0.0
        %1409 = vmatpush.msra.mxu0 %v1389
        %1410 = vmatmul.f32.gmra.mxu0 %v1392
        %v1411 = vpop.f32.mrf.mxu0
        %v1412 = vadd.f32 0.0, %v1411
        %1413 = vdwg.mxu0
        %v1415 = vsel %vm624, %v1412, 0
        %1417 = vmatpush.msra.mxu0 0.0
        %1418 = vmatpush.msra.mxu0 0.0
        %1419 = vmatpush.msra.mxu0 0.0
        %1420 = vmatpush.msra.mxu0 0.0
        %1421 = vmatpush.msra.mxu0 0.0
        %1422 = vmatpush.msra.mxu0 0.0
        %1423 = vmatpush.msra.mxu0 0.0
        %1424 = vmatpush.msra.mxu0 0.0
        %1425 = vmatpush.msra.mxu0 0.0
        %1426 = vmatpush.msra.mxu0 0.0
        %1427 = vmatpush.msra.mxu0 0.0
        %1428 = vmatpush.msra.mxu0 0.0
        %1429 = vmatpush.msra.mxu0 0.0
        %1430 = vmatpush.msra.mxu0 0.0
        %1431 = vmatpush.msra.mxu0 0.0
        %1432 = vmatpush.msra.mxu0 %v1162
        %1433 = vmatmul.f32.gmra.mxu0 %v1415
        %v1434 = vpop.f32.mrf.mxu0
        %v1435 = vadd.f32 0.0, %v1434
        %1436 = vdwg.mxu0
        %v1437 = vadd.f32 %v1347, %v1435
        %1438 = vrot.lane.b32.xlu0 %v1157, 104
        %v1439 = vpop.permute.xlu0 %1438
        %1440 = vrot.lane.b32.xlu0 %v1157, 72
        %v1441 = vpop.permute.xlu0 %1440
        %v1442 = vsel %vm624, %v1439, 0
        %v1444 = vsel %vm624, %v1441, 0
        %1446 = vmatpush.xpose.msra.mxu0 0.0
        %1447 = vmatpush.xpose.msra.mxu0 0.0
        %1448 = vmatpush.xpose.msra.mxu0 0.0
        %1449 = vmatpush.xpose.msra.mxu0 0.0
        %1450 = vmatpush.xpose.msra.mxu0 0.0
        %1451 = vmatpush.xpose.msra.mxu0 0.0
        %1452 = vmatpush.xpose.msra.mxu0 0.0
        %1453 = vmatpush.xpose.msra.mxu0 0.0
        %1454 = vmatpush.xpose.msra.mxu0 0.0
        %1455 = vmatpush.xpose.msra.mxu0 0.0
        %1456 = vmatpush.xpose.msra.mxu0 0.0
        %1457 = vmatpush.xpose.msra.mxu0 0.0
        %1458 = vmatpush.xpose.msra.mxu0 0.0
        %1459 = vmatpush.xpose.msra.mxu0 0.0
        %1460 = vmatpush.xpose.msra.mxu0 0.0
        %1461 = vmatpush.xpose.msra.mxu0 %v1444
        %1462 = vmatmul.f32.gmra.mxu0 %v1442
        %v1463 = vpop.f32.mrf.mxu0
        %v1464 = vadd.f32 0.0, %v1463
        %1465 = vdwg.mxu0
        %v1466 = vmul.f32 %v1464, 0.35355338
        %v1467 = vsel %vm624, %v1466, -inf
        %1468 = vmax.xlane.f32.xlu0 %v1467
        %v1469 = vpop.xlane.xlu0 %1468
        %v1470 = vsub.f32 %v1466, %v1469
        %v1471 = vmul.f32 %v1470, 1.442695
        %v1472 = vpow.pop %v1471
        %v1473 = vsel %vm624, %v1472, 0.0
        %1474 = vadd.xlane.f32.xlu0 %v1473
        %v1475 = vpop.xlane.xlu0 %1474
        %v1476 = vrcp.pop %v1475
        %v1477 = vmul.f32 %v1472, %v1476
        %1478 = vrot.lane.b32.xlu0 %v1157, 40
        %v1479 = vpop.permute.xlu0 %1478
        %v1482 = vsel %vm624, %v1477, 0
        %1484 = vmatpush.msra.mxu0 0.0
        %1485 = vmatpush.msra.mxu0 0.0
        %1486 = vmatpush.msra.mxu0 0.0
        %1487 = vmatpush.msra.mxu0 0.0
        %1488 = vmatpush.msra.mxu0 0.0
        %1489 = vmatpush.msra.mxu0 0.0
        %1490 = vmatpush.msra.mxu0 0.0
        %1491 = vmatpush.msra.mxu0 0.0
        %1492 = vmatpush.msra.mxu0 0.0
        %1493 = vmatpush.msra.mxu0 0.0
        %1494 = vmatpush.msra.mxu0 0.0
        %1495 = vmatpush.msra.mxu0 0.0
        %1496 = vmatpush.msra.mxu0 0.0
        %1497 = vmatpush.msra.mxu0 0.0
        %1498 = vmatpush.msra.mxu0 0.0
        %1499 = vmatpush.msra.mxu0 %v1479
        %1500 = vmatmul.f32.gmra.mxu0 %v1482
        %v1501 = vpop.f32.mrf.mxu0
        %v1502 = vadd.f32 0.0, %v1501
        %1503 = vdwg.mxu0
        %v1505 = vsel %vm624, %v1502, 0
        %1507 = vmatpush.msra.mxu0 0.0
        %1508 = vmatpush.msra.mxu0 0.0
        %1509 = vmatpush.msra.mxu0 0.0
        %1510 = vmatpush.msra.mxu0 0.0
        %1511 = vmatpush.msra.mxu0 0.0
        %1512 = vmatpush.msra.mxu0 0.0
        %1513 = vmatpush.msra.mxu0 0.0
        %1514 = vmatpush.msra.mxu0 0.0
        %1515 = vmatpush.msra.mxu0 0.0
        %1516 = vmatpush.msra.mxu0 0.0
        %1517 = vmatpush.msra.mxu0 0.0
        %1518 = vmatpush.msra.mxu0 0.0
        %1519 = vmatpush.msra.mxu0 0.0
        %1520 = vmatpush.msra.mxu0 0.0
        %1521 = vmatpush.msra.mxu0 0.0
        %1522 = vmatpush.msra.mxu0 %v1163
        %1523 = vmatmul.f32.gmra.mxu0 %v1505
        %v1524 = vpop.f32.mrf.mxu0
        %v1525 = vadd.f32 0.0, %v1524
        %1526 = vdwg.mxu0
        %v1527 = vadd.f32 %v1437, %v1525
        %v1528 = vadd.f32 %v1527, %v1125
        %s1529 = scalar_lea.vmem %s7, 1
        %v1530 = vld [vmem:[%s1529] sm:$0x1]
        %s1531 = scalar_lea.vmem %s8, 1
        %v1532 = vld [vmem:[%s1531] sm:$0x1]
        %v1533 = vsel %vm547, %v1528, 0.0
        %1534 = vadd.xlane.f32.xlu0 %v1533
        %v1535 = vpop.xlane.xlu0 %1534
        %v1536 = vmul.f32 %v1535, %v557
        %v1537 = vsub.f32 %v1528, %v1536
        %v1538 = vmul.f32 %v1537, %v1537
        %v1539 = vsel %vm547, %v1538, 0.0
        %1540 = vadd.xlane.f32.xlu0 %v1539
        %v1541 = vpop.xlane.xlu0 %1540
        %v1542 = vmul.f32 %v1541, %v557
        %v1543 = vadd.f32 %v1542, 1e-12
        %v1544 = vrsqrt.pop %v1543
        %v1545 = vmul.f32 %v1544, %v1543
        %v1546 = vmul.f32 %v1545, %v1544
        %v1547 = vmul.f32 0.5, %v1546
        %v1548 = vsub.f32 1.5, %v1547
        %v1549 = vmul.f32 %v1544, %v1548
        %vm1550 = vweird.f32 %v1543
        %vm1551 = vweird.f32 %v1544
        %vm1552 = vmor %vm1550, %vm1551
        %v1553 = vsel %vm1552, %v1544, %v1549
        %v1554 = vmul.f32 %v1537, %v1553
        %v1556 = vperm.slane %v1530, 0
        %v1558 = vmul.f32 %v1554, %v1556
        %v1560 = vperm.slane %v1532, 0
        %v1562 = vadd.f32 %v1558, %v1560
        %s1563 = scalar_lea.vmem %s9, 32
        %v1564 = vld [vmem:[%s1563] sm:$0xff]
        %v1565 = vld [vmem:[%s1563 + $0x8] sm:$0xff]
        %v1566 = vld [vmem:[%s1563 + $0x10] sm:$0xff]
        %v1567 = vld [vmem:[%s1563 + $0x18] sm:$0xff]
        %s1568 = scalar_lea.vmem %s10, 1
        %v1569 = vld [vmem:[%s1568] sm:$0x1]
        %v1571 = vperm.slane %v1569, 0
        %v1574 = vsel %vm547, %v1562, 0
        %1576 = vmatpush.msra.mxu0 0.0
        %1577 = vmatpush.msra.mxu0 0.0
        %1578 = vmatpush.msra.mxu0 0.0
        %1579 = vmatpush.msra.mxu0 0.0
        %1580 = vmatpush.msra.mxu0 0.0
        %1581 = vmatpush.msra.mxu0 0.0
        %1582 = vmatpush.msra.mxu0 0.0
        %1583 = vmatpush.msra.mxu0 0.0
        %1584 = vmatpush.msra.mxu0 0.0
        %1585 = vmatpush.msra.mxu0 0.0
        %1586 = vmatpush.msra.mxu0 0.0
        %1587 = vmatpush.msra.mxu0 0.0
        %1588 = vmatpush.msra.mxu0 %v1567
        %1589 = vmatpush.msra.mxu0 %v1566
        %1590 = vmatpush.msra.mxu0 %v1565
        %1591 = vmatpush.msra.mxu0 %v1564
        %1592 = vmatmul.f32.gmra.mxu0 %v1574
        %v1593 = vpop.f32.mrf.mxu0
        %v1594 = vadd.f32 %v1571, %v1593
        %1595 = vdwg.mxu0
        %v1596 = vmul.f32 %v1594, 0.5
        %v1597 = vmul.f32 %v1594, 0.044715
        %v1598 = vmul.f32 %v1597, %v1594
        %v1599 = vmul.f32 %v1598, %v1594
        %v1600 = vadd.f32 %v1594, %v1599
        %v1601 = vmul.f32 %v1600, 0.7978846
        %v1602 = vtanh.pop %v1601
        %v1603 = vadd.f32 %v1602, 1.0
        %v1604 = vmul.f32 %v1596, %v1603
        %s1605 = scalar_lea.vmem %s11, 64
        %v1606 = vld [vmem:[%s1605] sm:$0xff]
        %v1607 = vld [vmem:[%s1605 + $0x8] sm:$0xff]
        %v1608 = vld [vmem:[%s1605 + $0x10] sm:$0xff]
        %v1609 = vld [vmem:[%s1605 + $0x18] sm:$0xff]
        %v1610 = vld [vmem:[%s1605 + $0x20] sm:$0xff]
        %v1611 = vld [vmem:[%s1605 + $0x28] sm:$0xff]
        %v1612 = vld [vmem:[%s1605 + $0x30] sm:$0xff]
        %v1613 = vld [vmem:[%s1605 + $0x38] sm:$0xff]
        %s1614 = scalar_lea.vmem %s12, 1
        %v1615 = vld [vmem:[%s1614] sm:$0x1]
        %v1617 = vperm.slane %v1615, 0
        %v1620 = vsel %vm1069, %v1604, 0
        %1622 = vmatpush.msra.mxu0 0.0
        %1623 = vmatpush.msra.mxu0 0.0
        %1624 = vmatpush.msra.mxu0 0.0
        %1625 = vmatpush.msra.mxu0 0.0
        %1626 = vmatpush.msra.mxu0 0.0
        %1627 = vmatpush.msra.mxu0 0.0
        %1628 = vmatpush.msra.mxu0 0.0
        %1629 = vmatpush.msra.mxu0 0.0
        %1630 = vmatpush.msra.mxu0 %v1613
        %1631 = vmatpush.msra.mxu0 %v1612
        %1632 = vmatpush.msra.mxu0 %v1611
        %1633 = vmatpush.msra.mxu0 %v1610
        %1634 = vmatpush.msra.mxu0 %v1609
        %1635 = vmatpush.msra.mxu0 %v1608
        %1636 = vmatpush.msra.mxu0 %v1607
        %1637 = vmatpush.msra.mxu0 %v1606
        %1638 = vmatmul.f32.gmra.mxu0 %v1620
        %v1639 = vpop.f32.mrf.mxu0
        %v1640 = vadd.f32 %v1617, %v1639
        %1641 = vdwg.mxu0
        %v1642 = vadd.f32 %v1640, %v1562
        %s1643 = scalar_lea.vmem %s13, 1
        %v1644 = vld [vmem:[%s1643] sm:$0x1]
        %s1645 = scalar_lea.vmem %s14, 1
        %v1646 = vld [vmem:[%s1645] sm:$0x1]
        %v1647 = vsel %vm547, %v1642, 0.0
        %1648 = vadd.xlane.f32.xlu0 %v1647
        %v1649 = vpop.xlane.xlu0 %1648
        %v1650 = vmul.f32 %v1649, %v557
        %v1651 = vsub.f32 %v1642, %v1650
        %v1652 = vmul.f32 %v1651, %v1651
        %v1653 = vsel %vm547, %v1652, 0.0
        %1654 = vadd.xlane.f32.xlu0 %v1653
        %v1655 = vpop.xlane.xlu0 %1654
        %v1656 = vmul.f32 %v1655, %v557
        %v1657 = vadd.f32 %v1656, 1e-12
        %v1658 = vrsqrt.pop %v1657
        %v1659 = vmul.f32 %v1658, %v1657
        %v1660 = vmul.f32 %v1659, %v1658
        %v1661 = vmul.f32 0.5, %v1660
        %v1662 = vsub.f32 1.5, %v1661
        %v1663 = vmul.f32 %v1658, %v1662
        %vm1664 = vweird.f32 %v1657
        %vm1665 = vweird.f32 %v1658
        %vm1666 = vmor %vm1664, %vm1665
        %v1667 = vsel %vm1666, %v1658, %v1663
        %v1668 = vmul.f32 %v1651, %v1667
        %v1670 = vperm.slane %v1644, 0
        %v1672 = vmul.f32 %v1668, %v1670
        %v1674 = vperm.slane %v1646, 0
        %v1676 = vadd.f32 %v1672, %v1674
        %v1677 = vld [vmem:[%s15] sm:$0xff]
        %v1678 = vld [vmem:[%s15 + $0x8] sm:$0xff]
        %v1679 = vld [vmem:[%s15 + $0x10] sm:$0xff]
        %v1680 = vld [vmem:[%s15 + $0x18] sm:$0xff]
        %v1681 = vld [vmem:[%s16] sm:$0x1]
        %v1683 = vperm.slane %v1681, 0
        %v1686 = vsel %vm547, %v1676, 0
        %1688 = vmatpush.msra.mxu0 0.0
        %1689 = vmatpush.msra.mxu0 0.0
        %1690 = vmatpush.msra.mxu0 0.0
        %1691 = vmatpush.msra.mxu0 0.0
        %1692 = vmatpush.msra.mxu0 0.0
        %1693 = vmatpush.msra.mxu0 0.0
        %1694 = vmatpush.msra.mxu0 0.0
        %1695 = vmatpush.msra.mxu0 0.0
        %1696 = vmatpush.msra.mxu0 0.0
        %1697 = vmatpush.msra.mxu0 0.0
        %1698 = vmatpush.msra.mxu0 0.0
        %1699 = vmatpush.msra.mxu0 0.0
        %1700 = vmatpush.msra.mxu0 %v1680
        %1701 = vmatpush.msra.mxu0 %v1679
        %1702 = vmatpush.msra.mxu0 %v1678
        %1703 = vmatpush.msra.mxu0 %v1677
        %1704 = vmatmul.f32.gmra.mxu0 %v1686
        %v1705 = vpop.f32.mrf.mxu0
        %v1706 = vadd.f32 %v1683, %v1705
        %1707 = vdwg.mxu0
        %1708 = vst [vmem:[%s539] sm:$0xff] %v1706
        %s1709 = sand.u32 %s401, 1
        %s1710 = scalar_lea.sflag [#allocation3], %s1709
        %s1711 = sand.u32 %s401, 1
        %s1712 = smul.addr %s1711, 8
        %s1713 = scalar_lea.vmem [#allocation2], %s1712
        // Predicated region
        $region89: #{torch_model_forward.1} parent=87 // pred_check
          %p1714 = pneg %p411
        $region90: #{torch_model_forward.1} parent=87 // pred_check_branch
          %1716 = sbr.rel (%p1714) target = $region92
        $region91: #{torch_model_forward.1} parent=87 // pred_region
          %1718 = vsyncadd %s1710, 0
          %s1719 = smul.addr %s31, 8
          %s1720 = scalar_lea.hbm %s17, %s1719
          %s1722 = sshll.u32 %s1713, 4
          %s1723 = int_to_ptr.vmem [resolvable:$true] %s1722
          %s1724 = sshll.u32 %s1720, 4
          %s1725 = int_to_ptr.hbm [resolvable:$true] %s1724
          %1727 = dma.vmem_to_hbm [thread:$0]  %s1723, 128, %s1725, %s1710
        $region92: #{torch_model_forward.1} parent=87 // pred_fallthru
          _
      $region88: #{torch_model_forward.1} parent=5 // pred_fallthru
        _
      %p1728 = scmp.le.s32.totalorder 2, %s26
      // Predicated region
      $region93: #{torch_model_forward.1} parent=5 // pred_check
        %p1729 = pneg %p1728
      $region94: #{torch_model_forward.1} parent=5 // pred_check_branch
        %1731 = sbr.rel (%p1729) target = $region96
      $region95: #{torch_model_forward.1} parent=5 // pred_region
        %s1732 = ssub.s32 %s26, 2
        // Predicated region
        $region97: #{torch_model_forward.1} parent=95 // pred_check
          %p1733 = pneg %p417
        $region98: #{torch_model_forward.1} parent=95 // pred_check_branch
          %1735 = sbr.rel (%p1733) target = $region100
        $region99: #{torch_model_forward.1} parent=95 // pred_region
          %s1736 = sand.u32 %s402, 1
          %s1737 = scalar_lea.sflag [#allocation3], %s1736
          %s1738 = sand.u32 %s402, 1
          %s1739 = smul.addr %s1738, 8
          %s1740 = scalar_lea.vmem [#allocation2], %s1739
          %1742 = dma.done %s1737, 128
        $region100: #{torch_model_forward.1} parent=95 // pred_fallthru
          _
      $region96: #{torch_model_forward.1} parent=5 // pred_fallthru
        _
    $region6: #{torch_model_forward.1} parent=1 // loop_footer
      %s30 = sadd.s32 1, %s26
    $region7: #{torch_model_forward.1} parent=1 // loop_footer_branch
      %25 = sbr.rel target = $region3
    $region8: #{torch_model_forward.1} parent=1 // loop_exit
      _
    %1743 = vsyncpa [#allocation3], 1
    %s1744 = scalar_lea.sflag [#allocation3], 1
    %1745 = vsyncpa %s1744, 1

</llo_original>
